<compile_context>
chip_gen: v7x
topology: tpu7x:2x2x1
jax: 0.10.0
libtpu: 0.0.40
codegen_flags: <defaults>
</compile_context>

<pallas_src>
import functools

import jax
import jax.numpy as jnp
from jax.experimental import pallas as pl
from jax.experimental.pallas import tpu as pltpu


# ---------------------------------------------------------------------------
# Fused kernel: num_layers x LSTM recurrence + final Linear, one invocation.
#
# Ref layout (after the two leading static args bound by functools.partial):
#   x_ref                      : (T*Bp, Din)   time-major, flattened, batch-padded
#   for each layer l           : wih_l (Din_l, 4H), whh_l (H, 4H), b_l (1, 4H)
#   fc_w                       : (H, Op)       Linear weight (output padded to 128)
#   fc_b                       : (1, Op)
#   out_ref                    : (Bp, Op)
#   xp_scr                     : (T*Bp, 4H)    precomputed input projection (scratch)
#   y_scr                      : (T*Bp, H)     hidden sequence of current layer (scratch)
# ---------------------------------------------------------------------------
def fused_lstm_fc_kernel(num_layers, seq_len, x_ref, *refs):
    fc_w = refs[3 * num_layers]
    fc_b = refs[3 * num_layers + 1]
    out_ref = refs[3 * num_layers + 2]
    xp_scr = refs[3 * num_layers + 3]
    y_scr = refs[3 * num_layers + 4]

    TB = x_ref.shape[0]
    B = TB // seq_len                      # padded batch (multiple of 8)
    H = y_scr.shape[1]
    G = 4 * H

    # Loop-invariant lane mask selecting the 'g' gate range (tanh) of the slab.
    lane = jax.lax.broadcasted_iota(jnp.int32, (B, G), 1)
    g_mask = (lane >= 2 * H) & (lane < 3 * H)

    h_last = None
    for l in range(num_layers):
        wih = refs[3 * l]
        whh = refs[3 * l + 1]
        b = refs[3 * l + 2]

        # Hoisted input projection for all timesteps: one big MXU matmul.
        src = x_ref[...] if l == 0 else y_scr[...]           # (T*B, Din_l)
        xp_scr[...] = (
            jnp.dot(src, wih[...], preferred_element_type=jnp.float32) + b[...]
        )

        write_seq = l < num_layers - 1     # last layer: only final h is needed

        def step(t, carry, whh_ref=whh, write_seq=write_seq):
            h, c = carry
            row = pl.multiple_of(t * B, 8)
            gates = xp_scr[pl.ds(row, B), :] + jnp.dot(
                h, whh_ref[...], preferred_element_type=jnp.float32
            )                                                # (B, 4H)
            # Single masked activation pass over the whole slab.
            act = jnp.where(g_mask, jnp.tanh(gates), jax.nn.sigmoid(gates))
            i = act[:, 0 * H:1 * H]
            f = act[:, 1 * H:2 * H]
            g = act[:, 2 * H:3 * H]
            o = act[:, 3 * H:4 * H]
            c = f * c + i * g
            h = o * jnp.tanh(c)
            if write_seq:
                y_scr[pl.ds(row, B), :] = h
            return (h, c)

        carry0 = (jnp.zeros((B, H), jnp.float32), jnp.zeros((B, H), jnp.float32))
        h_last, _ = jax.lax.fori_loop(0, seq_len, step, carry0, unroll=True)

    # Final fully-connected layer (lane-dense (Bp, Op) store).
    out_ref[...] = (
        jnp.dot(h_last, fc_w[...], preferred_element_type=jnp.float32) + fc_b[...]
    )


def _round_up(n, m):
    return ((n + m - 1) // m) * m


# ---------------------------------------------------------------------------
# Full forward: x (B, T, input_size)  ->  (B, output_size)
# ---------------------------------------------------------------------------
@jax.jit
def recurrent_nn_forward(x, params):
    num_layers = len(params["lstm"])
    B, T, Din = x.shape
    H = params["lstm"][0]["w_hh_T"].shape[0]
    O = params["fc_w_T"].shape[1]

    B_pad = _round_up(max(B, 8), 8)        # fill f32 sublanes
    O_pad = _round_up(max(O, 128), 128)    # lane-dense output store

    # Time-major, batch-padded, flattened to (T*B_pad, Din).
    x_tm = jnp.transpose(x, (1, 0, 2)).astype(jnp.float32)         # (T, B, Din)
    x_tm = jnp.pad(x_tm, ((0, 0), (0, B_pad - B), (0, 0)))         # (T, Bp, Din)
    x_flat = x_tm.reshape(T * B_pad, Din)

    fc_w = jnp.pad(params["fc_w_T"].astype(jnp.float32), ((0, 0), (0, O_pad - O)))
    fc_b = jnp.pad(params["fc_b"].astype(jnp.float32), ((0, 0), (0, O_pad - O)))

    args = [x_flat]
    for layer in params["lstm"]:
        args += [layer["w_ih_T"], layer["w_hh_T"], layer["b"]]
    args += [fc_w, fc_b]

    vmem = pl.BlockSpec(memory_space=pltpu.MemorySpace.VMEM)
    out = pl.pallas_call(
        functools.partial(fused_lstm_fc_kernel, num_layers, T),
        out_shape=jax.ShapeDtypeStruct((B_pad, O_pad), jnp.float32),
        in_specs=[vmem] * len(args),
        out_specs=vmem,
        scratch_shapes=[
            pltpu.VMEM((T * B_pad, 4 * H), jnp.float32),   # precomputed gate inputs
            pltpu.VMEM((T * B_pad, H), jnp.float32),       # inter-layer hidden sequence
        ],
        # TODO(synk): at realistic T/B/H add a "parallel" batch-tile grid axis
        # (v7x second TensorCore) and tile the time axis against v7x's 64 MiB VMEM.
    )(*args)

    return out[:B, :O]                     # drop batch / output-lane padding


# ---------------------------------------------------------------------------
# Parameter init (deterministic), matching nn.LSTM / nn.Linear shapes.
#   LSTM layer l: W_ih (4H, Din_l), W_hh (4H, H), b_ih (4H), b_hh (4H)
#   Linear:      W (O, H), b (O)
# PyTorch default init is U(-1/sqrt(H), 1/sqrt(H)) for all of these.
# ---------------------------------------------------------------------------
def init_params(key, input_size, hidden_size, output_size, num_layers):
    H = hidden_size
    bound = 1.0 / jnp.sqrt(jnp.float32(H))

    def u(k, shape):
        return jax.random.uniform(k, shape, jnp.float32, -bound, bound)

    params = {"lstm": []}
    for l in range(num_layers):
        d_in = input_size if l == 0 else hidden_size
        key, k1, k2, k3, k4 = jax.random.split(key, 5)
        w_ih = u(k1, (4 * H, d_in))
        w_hh = u(k2, (4 * H, H))
        b_ih = u(k3, (4 * H,))
        b_hh = u(k4, (4 * H,))
        params["lstm"].append({
            "w_ih_T": w_ih.T,                              # (Din, 4H)
            "w_hh_T": w_hh.T,                              # (H,   4H)
            "b": (b_ih + b_hh).reshape(1, 4 * H),          # (1,   4H)
        })
    key, k5, k6 = jax.random.split(key, 3)
    params["fc_w_T"] = u(k5, (output_size, H)).T           # (H, O)
    params["fc_b"] = u(k6, (output_size,)).reshape(1, -1)  # (1, O)
    return params


# ---------------------------------------------------------------------------
# Pure-JAX reference (for correctness sanity check)
# ---------------------------------------------------------------------------
def reference_forward(x, params):
    x_tm = jnp.transpose(x, (1, 0, 2)).astype(jnp.float32)
    h_seq = x_tm
    for layer in params["lstm"]:
        H = layer["w_hh_T"].shape[0]
        B = h_seq.shape[1]

        def step(carry, x_t, layer=layer, H=H):
            h, c = carry
            gates = x_t @ layer["w_ih_T"] + h @ layer["w_hh_T"] + layer["b"]
            i = jax.nn.sigmoid(gates[:, :H])
            f = jax.nn.sigmoid(gates[:, H:2 * H])
            g = jnp.tanh(gates[:, 2 * H:3 * H])
            o = jax.nn.sigmoid(gates[:, 3 * H:4 * H])
            c = f * c + i * g
            h = o * jnp.tanh(c)
            return (h, c), h

        init = (jnp.zeros((B, H), jnp.float32), jnp.zeros((B, H), jnp.float32))
        _, h_seq = jax.lax.scan(step, init, h_seq)
    return h_seq[-1] @ params["fc_w_T"] + params["fc_b"]


if __name__ == "__main__":
    # Small shapes consistent with the module: batch=2, seq=8, input=16,
    # hidden=32, output=4, num_layers=2, drop_out=0.
    B, T, INPUT, HIDDEN, OUTPUT, LAYERS = 2, 8, 16, 32, 4, 2

    key = jax.random.PRNGKey(0)
    key, kx = jax.random.split(key)
    x = jax.random.normal(kx, (B, T, INPUT), jnp.float32)
    params = init_params(key, INPUT, HIDDEN, OUTPUT, LAYERS)

    out = recurrent_nn_forward(x, params)
    out = jax.block_until_ready(out)

    ref = reference_forward(x, params)
    assert out.shape == (B, OUTPUT)
    assert jnp.allclose(out, ref, atol=2e-5, rtol=1e-5), (out, ref)

    print("KERNEL_OK")
</pallas_src>

<mosaic_0001>
module attributes {stable_mosaic.version = 11 : i64} {
  func.func @fused_lstm_fc_kernel(%arg0: memref<64x16xf32, #tpu.memory_space<vmem>>, %arg1: memref<16x128xf32, #tpu.memory_space<vmem>>, %arg2: memref<32x128xf32, #tpu.memory_space<vmem>>, %arg3: memref<1x128xf32, #tpu.memory_space<vmem>>, %arg4: memref<32x128xf32, #tpu.memory_space<vmem>>, %arg5: memref<32x128xf32, #tpu.memory_space<vmem>>, %arg6: memref<1x128xf32, #tpu.memory_space<vmem>>, %arg7: memref<32x128xf32, #tpu.memory_space<vmem>>, %arg8: memref<1x128xf32, #tpu.memory_space<vmem>>, %arg9: memref<8x128xf32, #tpu.memory_space<vmem>>, %arg10: memref<64x128xf32, #tpu.memory_space<vmem>>, %arg11: memref<64x32xf32, #tpu.memory_space<vmem>>) attributes {dimension_semantics = [], scalar_prefetch = 0 : i64, scratch_operands = 2 : i64, tpu.core_type = #tpu.core_type<tc>} {
    %0 = tpu.iota {dimensions = array<i32: 1>} : vector<8x128xi32>
    %c64_i32 = arith.constant 64 : i32
    %1 = vector.broadcast %c64_i32 : i32 to vector<8x128xi32>
    %2 = arith.cmpi sge, %0, %1 : vector<8x128xi32>
    %c96_i32 = arith.constant 96 : i32
    %3 = vector.broadcast %c96_i32 : i32 to vector<8x128xi32>
    %4 = arith.cmpi slt, %0, %3 : vector<8x128xi32>
    %5 = arith.andi %2, %4 : vector<8x128xi1>
    %c0 = arith.constant 0 : index
    %c0_0 = arith.constant 0 : index
    %6 = vector.load %arg0[%c0, %c0_0] : memref<64x16xf32, #tpu.memory_space<vmem>>, vector<64x16xf32>
    %c0_1 = arith.constant 0 : index
    %c0_2 = arith.constant 0 : index
    %7 = vector.load %arg1[%c0_1, %c0_2] : memref<16x128xf32, #tpu.memory_space<vmem>>, vector<16x128xf32>
    %cst = arith.constant dense<0.000000e+00> : vector<64x128xf32>
    %8 = tpu.matmul %6, %7, %cst {dimension_numbers = #tpu.dot_dimension_numbers<[1], [0], [0], [1], [0, 0, 1, 1], [], []>} : vector<64x16xf32>, vector<16x128xf32>, vector<64x128xf32> -> vector<64x128xf32>
    %c0_3 = arith.constant 0 : index
    %c0_4 = arith.constant 0 : index
    %9 = vector.load %arg3[%c0_3, %c0_4] : memref<1x128xf32, #tpu.memory_space<vmem>>, vector<1x128xf32>
    %10 = vector.broadcast %9 : vector<1x128xf32> to vector<64x128xf32>
    %11 = arith.addf %8, %10 : vector<64x128xf32>
    %c0_5 = arith.constant 0 : index
    %c0_6 = arith.constant 0 : index
    %12 = vector.load %arg10[%c0_5, %c0_6] : memref<64x128xf32, #tpu.memory_space<vmem>>, vector<64x128xf32>
    tpu.vector_store %arg10[%c0_5, %c0_6], %11 {strides = array<i32>} : memref<64x128xf32, #tpu.memory_space<vmem>>, vector<64x128xf32>,
    %cst_7 = arith.constant 0.000000e+00 : f32
    %13 = vector.broadcast %cst_7 : f32 to vector<8x32xf32>
    %cst_8 = arith.constant 0.000000e+00 : f32
    %14 = vector.broadcast %cst_8 : f32 to vector<8x32xf32>
    %c0_i32 = arith.constant 0 : i32
    %c8_i32 = arith.constant 8 : i32
    %15 = arith.muli %c0_i32, %c8_i32 : i32
    %16 = tpu.assume_multiple %15, 8 : i32
    %17 = arith.index_cast %16 : i32 to index
    %c0_9 = arith.constant 0 : index
    %18 = vector.load %arg10[%17, %c0_9] : memref<64x128xf32, #tpu.memory_space<vmem>>, vector<8x128xf32>
    %c0_10 = arith.constant 0 : index
    %c0_11 = arith.constant 0 : index
    %19 = vector.load %arg2[%c0_10, %c0_11] : memref<32x128xf32, #tpu.memory_space<vmem>>, vector<32x128xf32>
    %cst_12 = arith.constant dense<0.000000e+00> : vector<8x128xf32>
    %20 = tpu.matmul %13, %19, %cst_12 {dimension_numbers = #tpu.dot_dimension_numbers<[1], [0], [0], [1], [0, 0, 1, 1], [], []>} : vector<8x32xf32>, vector<32x128xf32>, vector<8x128xf32> -> vector<8x128xf32>
    %21 = arith.addf %18, %20 : vector<8x128xf32>
    %22 = math.tanh %21 : vector<8x128xf32>
    %23 = arith.negf %21 : vector<8x128xf32>
    %24 = math.exp %23 : vector<8x128xf32>
    %cst_13 = arith.constant 1.000000e+00 : f32
    %25 = vector.broadcast %cst_13 : f32 to vector<8x128xf32>
    %26 = arith.addf %25, %24 : vector<8x128xf32>
    %27 = arith.divf %25, %26 : vector<8x128xf32>
    %28 = arith.select %5, %22, %27 : vector<8x128xi1>, vector<8x128xf32>
    %29 = vector.extract_strided_slice %28 {offsets = [0, 0], sizes = [8, 32], strides = [1, 1]} : vector<8x128xf32> to vector<8x32xf32>
    %30 = vector.extract_strided_slice %28 {offsets = [0, 32], sizes = [8, 32], strides = [1, 1]} : vector<8x128xf32> to vector<8x32xf32>
    %31 = vector.extract_strided_slice %28 {offsets = [0, 64], sizes = [8, 32], strides = [1, 1]} : vector<8x128xf32> to vector<8x32xf32>
    %32 = vector.extract_strided_slice %28 {offsets = [0, 96], sizes = [8, 32], strides = [1, 1]} : vector<8x128xf32> to vector<8x32xf32>
    %33 = arith.mulf %30, %14 : vector<8x32xf32>
    %34 = arith.mulf %29, %31 : vector<8x32xf32>
    %35 = arith.addf %33, %34 : vector<8x32xf32>
    %36 = math.tanh %35 : vector<8x32xf32>
    %37 = arith.mulf %32, %36 : vector<8x32xf32>
    %38 = arith.index_cast %16 : i32 to index
    %c0_14 = arith.constant 0 : index
    %39 = vector.load %arg11[%38, %c0_14] : memref<64x32xf32, #tpu.memory_space<vmem>>, vector<8x32xf32>
    tpu.vector_store %arg11[%38, %c0_14], %37 {strides = array<i32>} : memref<64x32xf32, #tpu.memory_space<vmem>>, vector<8x32xf32>,
    %c1_i32 = arith.constant 1 : i32
    %c8_i32_15 = arith.constant 8 : i32
    %40 = arith.muli %c1_i32, %c8_i32_15 : i32
    %41 = tpu.assume_multiple %40, 8 : i32
    %42 = arith.index_cast %41 : i32 to index
    %c0_16 = arith.constant 0 : index
    %43 = vector.load %arg10[%42, %c0_16] : memref<64x128xf32, #tpu.memory_space<vmem>>, vector<8x128xf32>
    %c0_17 = arith.constant 0 : index
    %c0_18 = arith.constant 0 : index
    %44 = vector.load %arg2[%c0_17, %c0_18] : memref<32x128xf32, #tpu.memory_space<vmem>>, vector<32x128xf32>
    %cst_19 = arith.constant dense<0.000000e+00> : vector<8x128xf32>
    %45 = tpu.matmul %37, %44, %cst_19 {dimension_numbers = #tpu.dot_dimension_numbers<[1], [0], [0], [1], [0, 0, 1, 1], [], []>} : vector<8x32xf32>, vector<32x128xf32>, vector<8x128xf32> -> vector<8x128xf32>
    %46 = arith.addf %43, %45 : vector<8x128xf32>
    %47 = math.tanh %46 : vector<8x128xf32>
    %48 = arith.negf %46 : vector<8x128xf32>
    %49 = math.exp %48 : vector<8x128xf32>
    %cst_20 = arith.constant 1.000000e+00 : f32
    %50 = vector.broadcast %cst_20 : f32 to vector<8x128xf32>
    %51 = arith.addf %50, %49 : vector<8x128xf32>
    %52 = arith.divf %50, %51 : vector<8x128xf32>
    %53 = arith.select %5, %47, %52 : vector<8x128xi1>, vector<8x128xf32>
    %54 = vector.extract_strided_slice %53 {offsets = [0, 0], sizes = [8, 32], strides = [1, 1]} : vector<8x128xf32> to vector<8x32xf32>
    %55 = vector.extract_strided_slice %53 {offsets = [0, 32], sizes = [8, 32], strides = [1, 1]} : vector<8x128xf32> to vector<8x32xf32>
    %56 = vector.extract_strided_slice %53 {offsets = [0, 64], sizes = [8, 32], strides = [1, 1]} : vector<8x128xf32> to vector<8x32xf32>
    %57 = vector.extract_strided_slice %53 {offsets = [0, 96], sizes = [8, 32], strides = [1, 1]} : vector<8x128xf32> to vector<8x32xf32>
    %58 = arith.mulf %55, %35 : vector<8x32xf32>
    %59 = arith.mulf %54, %56 : vector<8x32xf32>
    %60 = arith.addf %58, %59 : vector<8x32xf32>
    %61 = math.tanh %60 : vector<8x32xf32>
    %62 = arith.mulf %57, %61 : vector<8x32xf32>
    %63 = arith.index_cast %41 : i32 to index
    %c0_21 = arith.constant 0 : index
    %64 = vector.load %arg11[%63, %c0_21] : memref<64x32xf32, #tpu.memory_space<vmem>>, vector<8x32xf32>
    tpu.vector_store %arg11[%63, %c0_21], %62 {strides = array<i32>} : memref<64x32xf32, #tpu.memory_space<vmem>>, vector<8x32xf32>,
    %c2_i32 = arith.constant 2 : i32
    %c8_i32_22 = arith.constant 8 : i32
    %65 = arith.muli %c2_i32, %c8_i32_22 : i32
    %66 = tpu.assume_multiple %65, 8 : i32
    %67 = arith.index_cast %66 : i32 to index
    %c0_23 = arith.constant 0 : index
    %68 = vector.load %arg10[%67, %c0_23] : memref<64x128xf32, #tpu.memory_space<vmem>>, vector<8x128xf32>
    %c0_24 = arith.constant 0 : index
    %c0_25 = arith.constant 0 : index
    %69 = vector.load %arg2[%c0_24, %c0_25] : memref<32x128xf32, #tpu.memory_space<vmem>>, vector<32x128xf32>
    %cst_26 = arith.constant dense<0.000000e+00> : vector<8x128xf32>
    %70 = tpu.matmul %62, %69, %cst_26 {dimension_numbers = #tpu.dot_dimension_numbers<[1], [0], [0], [1], [0, 0, 1, 1], [], []>} : vector<8x32xf32>, vector<32x128xf32>, vector<8x128xf32> -> vector<8x128xf32>
    %71 = arith.addf %68, %70 : vector<8x128xf32>
    %72 = math.tanh %71 : vector<8x128xf32>
    %73 = arith.negf %71 : vector<8x128xf32>
    %74 = math.exp %73 : vector<8x128xf32>
    %cst_27 = arith.constant 1.000000e+00 : f32
    %75 = vector.broadcast %cst_27 : f32 to vector<8x128xf32>
    %76 = arith.addf %75, %74 : vector<8x128xf32>
    %77 = arith.divf %75, %76 : vector<8x128xf32>
    %78 = arith.select %5, %72, %77 : vector<8x128xi1>, vector<8x128xf32>
    %79 = vector.extract_strided_slice %78 {offsets = [0, 0], sizes = [8, 32], strides = [1, 1]} : vector<8x128xf32> to vector<8x32xf32>
    %80 = vector.extract_strided_slice %78 {offsets = [0, 32], sizes = [8, 32], strides = [1, 1]} : vector<8x128xf32> to vector<8x32xf32>
    %81 = vector.extract_strided_slice %78 {offsets = [0, 64], sizes = [8, 32], strides = [1, 1]} : vector<8x128xf32> to vector<8x32xf32>
    %82 = vector.extract_strided_slice %78 {offsets = [0, 96], sizes = [8, 32], strides = [1, 1]} : vector<8x128xf32> to vector<8x32xf32>
    %83 = arith.mulf %80, %60 : vector<8x32xf32>
    %84 = arith.mulf %79, %81 : vector<8x32xf32>
    %85 = arith.addf %83, %84 : vector<8x32xf32>
    %86 = math.tanh %85 : vector<8x32xf32>
    %87 = arith.mulf %82, %86 : vector<8x32xf32>
    %88 = arith.index_cast %66 : i32 to index
    %c0_28 = arith.constant 0 : index
    %89 = vector.load %arg11[%88, %c0_28] : memref<64x32xf32, #tpu.memory_space<vmem>>, vector<8x32xf32>
    tpu.vector_store %arg11[%88, %c0_28], %87 {strides = array<i32>} : memref<64x32xf32, #tpu.memory_space<vmem>>, vector<8x32xf32>,
    %c3_i32 = arith.constant 3 : i32
    %c8_i32_29 = arith.constant 8 : i32
    %90 = arith.muli %c3_i32, %c8_i32_29 : i32
    %91 = tpu.assume_multiple %90, 8 : i32
    %92 = arith.index_cast %91 : i32 to index
    %c0_30 = arith.constant 0 : index
    %93 = vector.load %arg10[%92, %c0_30] : memref<64x128xf32, #tpu.memory_space<vmem>>, vector<8x128xf32>
    %c0_31 = arith.constant 0 : index
    %c0_32 = arith.constant 0 : index
    %94 = vector.load %arg2[%c0_31, %c0_32] : memref<32x128xf32, #tpu.memory_space<vmem>>, vector<32x128xf32>
    %cst_33 = arith.constant dense<0.000000e+00> : vector<8x128xf32>
    %95 = tpu.matmul %87, %94, %cst_33 {dimension_numbers = #tpu.dot_dimension_numbers<[1], [0], [0], [1], [0, 0, 1, 1], [], []>} : vector<8x32xf32>, vector<32x128xf32>, vector<8x128xf32> -> vector<8x128xf32>
    %96 = arith.addf %93, %95 : vector<8x128xf32>
    %97 = math.tanh %96 : vector<8x128xf32>
    %98 = arith.negf %96 : vector<8x128xf32>
    %99 = math.exp %98 : vector<8x128xf32>
    %cst_34 = arith.constant 1.000000e+00 : f32
    %100 = vector.broadcast %cst_34 : f32 to vector<8x128xf32>
    %101 = arith.addf %100, %99 : vector<8x128xf32>
    %102 = arith.divf %100, %101 : vector<8x128xf32>
    %103 = arith.select %5, %97, %102 : vector<8x128xi1>, vector<8x128xf32>
    %104 = vector.extract_strided_slice %103 {offsets = [0, 0], sizes = [8, 32], strides = [1, 1]} : vector<8x128xf32> to vector<8x32xf32>
    %105 = vector.extract_strided_slice %103 {offsets = [0, 32], sizes = [8, 32], strides = [1, 1]} : vector<8x128xf32> to vector<8x32xf32>
    %106 = vector.extract_strided_slice %103 {offsets = [0, 64], sizes = [8, 32], strides = [1, 1]} : vector<8x128xf32> to vector<8x32xf32>
    %107 = vector.extract_strided_slice %103 {offsets = [0, 96], sizes = [8, 32], strides = [1, 1]} : vector<8x128xf32> to vector<8x32xf32>
    %108 = arith.mulf %105, %85 : vector<8x32xf32>
    %109 = arith.mulf %104, %106 : vector<8x32xf32>
    %110 = arith.addf %108, %109 : vector<8x32xf32>
    %111 = math.tanh %110 : vector<8x32xf32>
    %112 = arith.mulf %107, %111 : vector<8x32xf32>
    %113 = arith.index_cast %91 : i32 to index
    %c0_35 = arith.constant 0 : index
    %114 = vector.load %arg11[%113, %c0_35] : memref<64x32xf32, #tpu.memory_space<vmem>>, vector<8x32xf32>
    tpu.vector_store %arg11[%113, %c0_35], %112 {strides = array<i32>} : memref<64x32xf32, #tpu.memory_space<vmem>>, vector<8x32xf32>,
    %c4_i32 = arith.constant 4 : i32
    %c8_i32_36 = arith.constant 8 : i32
    %115 = arith.muli %c4_i32, %c8_i32_36 : i32
    %116 = tpu.assume_multiple %115, 8 : i32
    %117 = arith.index_cast %116 : i32 to index
    %c0_37 = arith.constant 0 : index
    %118 = vector.load %arg10[%117, %c0_37] : memref<64x128xf32, #tpu.memory_space<vmem>>, vector<8x128xf32>
    %c0_38 = arith.constant 0 : index
    %c0_39 = arith.constant 0 : index
    %119 = vector.load %arg2[%c0_38, %c0_39] : memref<32x128xf32, #tpu.memory_space<vmem>>, vector<32x128xf32>
    %cst_40 = arith.constant dense<0.000000e+00> : vector<8x128xf32>
    %120 = tpu.matmul %112, %119, %cst_40 {dimension_numbers = #tpu.dot_dimension_numbers<[1], [0], [0], [1], [0, 0, 1, 1], [], []>} : vector<8x32xf32>, vector<32x128xf32>, vector<8x128xf32> -> vector<8x128xf32>
    %121 = arith.addf %118, %120 : vector<8x128xf32>
    %122 = math.tanh %121 : vector<8x128xf32>
    %123 = arith.negf %121 : vector<8x128xf32>
    %124 = math.exp %123 : vector<8x128xf32>
    %cst_41 = arith.constant 1.000000e+00 : f32
    %125 = vector.broadcast %cst_41 : f32 to vector<8x128xf32>
    %126 = arith.addf %125, %124 : vector<8x128xf32>
    %127 = arith.divf %125, %126 : vector<8x128xf32>
    %128 = arith.select %5, %122, %127 : vector<8x128xi1>, vector<8x128xf32>
    %129 = vector.extract_strided_slice %128 {offsets = [0, 0], sizes = [8, 32], strides = [1, 1]} : vector<8x128xf32> to vector<8x32xf32>
    %130 = vector.extract_strided_slice %128 {offsets = [0, 32], sizes = [8, 32], strides = [1, 1]} : vector<8x128xf32> to vector<8x32xf32>
    %131 = vector.extract_strided_slice %128 {offsets = [0, 64], sizes = [8, 32], strides = [1, 1]} : vector<8x128xf32> to vector<8x32xf32>
    %132 = vector.extract_strided_slice %128 {offsets = [0, 96], sizes = [8, 32], strides = [1, 1]} : vector<8x128xf32> to vector<8x32xf32>
    %133 = arith.mulf %130, %110 : vector<8x32xf32>
    %134 = arith.mulf %129, %131 : vector<8x32xf32>
    %135 = arith.addf %133, %134 : vector<8x32xf32>
    %136 = math.tanh %135 : vector<8x32xf32>
    %137 = arith.mulf %132, %136 : vector<8x32xf32>
    %138 = arith.index_cast %116 : i32 to index
    %c0_42 = arith.constant 0 : index
    %139 = vector.load %arg11[%138, %c0_42] : memref<64x32xf32, #tpu.memory_space<vmem>>, vector<8x32xf32>
    tpu.vector_store %arg11[%138, %c0_42], %137 {strides = array<i32>} : memref<64x32xf32, #tpu.memory_space<vmem>>, vector<8x32xf32>,
    %c5_i32 = arith.constant 5 : i32
    %c8_i32_43 = arith.constant 8 : i32
    %140 = arith.muli %c5_i32, %c8_i32_43 : i32
    %141 = tpu.assume_multiple %140, 8 : i32
    %142 = arith.index_cast %141 : i32 to index
    %c0_44 = arith.constant 0 : index
    %143 = vector.load %arg10[%142, %c0_44] : memref<64x128xf32, #tpu.memory_space<vmem>>, vector<8x128xf32>
    %c0_45 = arith.constant 0 : index
    %c0_46 = arith.constant 0 : index
    %144 = vector.load %arg2[%c0_45, %c0_46] : memref<32x128xf32, #tpu.memory_space<vmem>>, vector<32x128xf32>
    %cst_47 = arith.constant dense<0.000000e+00> : vector<8x128xf32>
    %145 = tpu.matmul %137, %144, %cst_47 {dimension_numbers = #tpu.dot_dimension_numbers<[1], [0], [0], [1], [0, 0, 1, 1], [], []>} : vector<8x32xf32>, vector<32x128xf32>, vector<8x128xf32> -> vector<8x128xf32>
    %146 = arith.addf %143, %145 : vector<8x128xf32>
    %147 = math.tanh %146 : vector<8x128xf32>
    %148 = arith.negf %146 : vector<8x128xf32>
    %149 = math.exp %148 : vector<8x128xf32>
    %cst_48 = arith.constant 1.000000e+00 : f32
    %150 = vector.broadcast %cst_48 : f32 to vector<8x128xf32>
    %151 = arith.addf %150, %149 : vector<8x128xf32>
    %152 = arith.divf %150, %151 : vector<8x128xf32>
    %153 = arith.select %5, %147, %152 : vector<8x128xi1>, vector<8x128xf32>
    %154 = vector.extract_strided_slice %153 {offsets = [0, 0], sizes = [8, 32], strides = [1, 1]} : vector<8x128xf32> to vector<8x32xf32>
    %155 = vector.extract_strided_slice %153 {offsets = [0, 32], sizes = [8, 32], strides = [1, 1]} : vector<8x128xf32> to vector<8x32xf32>
    %156 = vector.extract_strided_slice %153 {offsets = [0, 64], sizes = [8, 32], strides = [1, 1]} : vector<8x128xf32> to vector<8x32xf32>
    %157 = vector.extract_strided_slice %153 {offsets = [0, 96], sizes = [8, 32], strides = [1, 1]} : vector<8x128xf32> to vector<8x32xf32>
    %158 = arith.mulf %155, %135 : vector<8x32xf32>
    %159 = arith.mulf %154, %156 : vector<8x32xf32>
    %160 = arith.addf %158, %159 : vector<8x32xf32>
    %161 = math.tanh %160 : vector<8x32xf32>
    %162 = arith.mulf %157, %161 : vector<8x32xf32>
    %163 = arith.index_cast %141 : i32 to index
    %c0_49 = arith.constant 0 : index
    %164 = vector.load %arg11[%163, %c0_49] : memref<64x32xf32, #tpu.memory_space<vmem>>, vector<8x32xf32>
    tpu.vector_store %arg11[%163, %c0_49], %162 {strides = array<i32>} : memref<64x32xf32, #tpu.memory_space<vmem>>, vector<8x32xf32>,
    %c6_i32 = arith.constant 6 : i32
    %c8_i32_50 = arith.constant 8 : i32
    %165 = arith.muli %c6_i32, %c8_i32_50 : i32
    %166 = tpu.assume_multiple %165, 8 : i32
    %167 = arith.index_cast %166 : i32 to index
    %c0_51 = arith.constant 0 : index
    %168 = vector.load %arg10[%167, %c0_51] : memref<64x128xf32, #tpu.memory_space<vmem>>, vector<8x128xf32>
    %c0_52 = arith.constant 0 : index
    %c0_53 = arith.constant 0 : index
    %169 = vector.load %arg2[%c0_52, %c0_53] : memref<32x128xf32, #tpu.memory_space<vmem>>, vector<32x128xf32>
    %cst_54 = arith.constant dense<0.000000e+00> : vector<8x128xf32>
    %170 = tpu.matmul %162, %169, %cst_54 {dimension_numbers = #tpu.dot_dimension_numbers<[1], [0], [0], [1], [0, 0, 1, 1], [], []>} : vector<8x32xf32>, vector<32x128xf32>, vector<8x128xf32> -> vector<8x128xf32>
    %171 = arith.addf %168, %170 : vector<8x128xf32>
    %172 = math.tanh %171 : vector<8x128xf32>
    %173 = arith.negf %171 : vector<8x128xf32>
    %174 = math.exp %173 : vector<8x128xf32>
    %cst_55 = arith.constant 1.000000e+00 : f32
    %175 = vector.broadcast %cst_55 : f32 to vector<8x128xf32>
    %176 = arith.addf %175, %174 : vector<8x128xf32>
    %177 = arith.divf %175, %176 : vector<8x128xf32>
    %178 = arith.select %5, %172, %177 : vector<8x128xi1>, vector<8x128xf32>
    %179 = vector.extract_strided_slice %178 {offsets = [0, 0], sizes = [8, 32], strides = [1, 1]} : vector<8x128xf32> to vector<8x32xf32>
    %180 = vector.extract_strided_slice %178 {offsets = [0, 32], sizes = [8, 32], strides = [1, 1]} : vector<8x128xf32> to vector<8x32xf32>
    %181 = vector.extract_strided_slice %178 {offsets = [0, 64], sizes = [8, 32], strides = [1, 1]} : vector<8x128xf32> to vector<8x32xf32>
    %182 = vector.extract_strided_slice %178 {offsets = [0, 96], sizes = [8, 32], strides = [1, 1]} : vector<8x128xf32> to vector<8x32xf32>
    %183 = arith.mulf %180, %160 : vector<8x32xf32>
    %184 = arith.mulf %179, %181 : vector<8x32xf32>
    %185 = arith.addf %183, %184 : vector<8x32xf32>
    %186 = math.tanh %185 : vector<8x32xf32>
    %187 = arith.mulf %182, %186 : vector<8x32xf32>
    %188 = arith.index_cast %166 : i32 to index
    %c0_56 = arith.constant 0 : index
    %189 = vector.load %arg11[%188, %c0_56] : memref<64x32xf32, #tpu.memory_space<vmem>>, vector<8x32xf32>
    tpu.vector_store %arg11[%188, %c0_56], %187 {strides = array<i32>} : memref<64x32xf32, #tpu.memory_space<vmem>>, vector<8x32xf32>,
    %c7_i32 = arith.constant 7 : i32
    %c8_i32_57 = arith.constant 8 : i32
    %190 = arith.muli %c7_i32, %c8_i32_57 : i32
    %191 = tpu.assume_multiple %190, 8 : i32
    %192 = arith.index_cast %191 : i32 to index
    %c0_58 = arith.constant 0 : index
    %193 = vector.load %arg10[%192, %c0_58] : memref<64x128xf32, #tpu.memory_space<vmem>>, vector<8x128xf32>
    %c0_59 = arith.constant 0 : index
    %c0_60 = arith.constant 0 : index
    %194 = vector.load %arg2[%c0_59, %c0_60] : memref<32x128xf32, #tpu.memory_space<vmem>>, vector<32x128xf32>
    %cst_61 = arith.constant dense<0.000000e+00> : vector<8x128xf32>
    %195 = tpu.matmul %187, %194, %cst_61 {dimension_numbers = #tpu.dot_dimension_numbers<[1], [0], [0], [1], [0, 0, 1, 1], [], []>} : vector<8x32xf32>, vector<32x128xf32>, vector<8x128xf32> -> vector<8x128xf32>
    %196 = arith.addf %193, %195 : vector<8x128xf32>
    %197 = math.tanh %196 : vector<8x128xf32>
    %198 = arith.negf %196 : vector<8x128xf32>
    %199 = math.exp %198 : vector<8x128xf32>
    %cst_62 = arith.constant 1.000000e+00 : f32
    %200 = vector.broadcast %cst_62 : f32 to vector<8x128xf32>
    %201 = arith.addf %200, %199 : vector<8x128xf32>
    %202 = arith.divf %200, %201 : vector<8x128xf32>
    %203 = arith.select %5, %197, %202 : vector<8x128xi1>, vector<8x128xf32>
    %204 = vector.extract_strided_slice %203 {offsets = [0, 0], sizes = [8, 32], strides = [1, 1]} : vector<8x128xf32> to vector<8x32xf32>
    %205 = vector.extract_strided_slice %203 {offsets = [0, 32], sizes = [8, 32], strides = [1, 1]} : vector<8x128xf32> to vector<8x32xf32>
    %206 = vector.extract_strided_slice %203 {offsets = [0, 64], sizes = [8, 32], strides = [1, 1]} : vector<8x128xf32> to vector<8x32xf32>
    %207 = vector.extract_strided_slice %203 {offsets = [0, 96], sizes = [8, 32], strides = [1, 1]} : vector<8x128xf32> to vector<8x32xf32>
    %208 = arith.mulf %205, %185 : vector<8x32xf32>
    %209 = arith.mulf %204, %206 : vector<8x32xf32>
    %210 = arith.addf %208, %209 : vector<8x32xf32>
    %211 = math.tanh %210 : vector<8x32xf32>
    %212 = arith.mulf %207, %211 : vector<8x32xf32>
    %213 = arith.index_cast %191 : i32 to index
    %c0_63 = arith.constant 0 : index
    %214 = vector.load %arg11[%213, %c0_63] : memref<64x32xf32, #tpu.memory_space<vmem>>, vector<8x32xf32>
    tpu.vector_store %arg11[%213, %c0_63], %212 {strides = array<i32>} : memref<64x32xf32, #tpu.memory_space<vmem>>, vector<8x32xf32>,
    %c8_i32_64 = arith.constant 8 : i32
    %c0_65 = arith.constant 0 : index
    %c0_66 = arith.constant 0 : index
    %215 = vector.load %arg11[%c0_65, %c0_66] : memref<64x32xf32, #tpu.memory_space<vmem>>, vector<64x32xf32>
    %c0_67 = arith.constant 0 : index
    %c0_68 = arith.constant 0 : index
    %216 = vector.load %arg4[%c0_67, %c0_68] : memref<32x128xf32, #tpu.memory_space<vmem>>, vector<32x128xf32>
    %cst_69 = arith.constant dense<0.000000e+00> : vector<64x128xf32>
    %217 = tpu.matmul %215, %216, %cst_69 {dimension_numbers = #tpu.dot_dimension_numbers<[1], [0], [0], [1], [0, 0, 1, 1], [], []>} : vector<64x32xf32>, vector<32x128xf32>, vector<64x128xf32> -> vector<64x128xf32>
    %c0_70 = arith.constant 0 : index
    %c0_71 = arith.constant 0 : index
    %218 = vector.load %arg6[%c0_70, %c0_71] : memref<1x128xf32, #tpu.memory_space<vmem>>, vector<1x128xf32>
    %219 = vector.broadcast %218 : vector<1x128xf32> to vector<64x128xf32>
    %220 = arith.addf %217, %219 : vector<64x128xf32>
    %c0_72 = arith.constant 0 : index
    %c0_73 = arith.constant 0 : index
    %221 = vector.load %arg10[%c0_72, %c0_73] : memref<64x128xf32, #tpu.memory_space<vmem>>, vector<64x128xf32>
    tpu.vector_store %arg10[%c0_72, %c0_73], %220 {strides = array<i32>} : memref<64x128xf32, #tpu.memory_space<vmem>>, vector<64x128xf32>,
    %cst_74 = arith.constant 0.000000e+00 : f32
    %222 = vector.broadcast %cst_74 : f32 to vector<8x32xf32>
    %cst_75 = arith.constant 0.000000e+00 : f32
    %223 = vector.broadcast %cst_75 : f32 to vector<8x32xf32>
    %c0_i32_76 = arith.constant 0 : i32
    %c8_i32_77 = arith.constant 8 : i32
    %224 = arith.muli %c0_i32_76, %c8_i32_77 : i32
    %225 = tpu.assume_multiple %224, 8 : i32
    %226 = arith.index_cast %225 : i32 to index
    %c0_78 = arith.constant 0 : index
    %227 = vector.load %arg10[%226, %c0_78] : memref<64x128xf32, #tpu.memory_space<vmem>>, vector<8x128xf32>
    %c0_79 = arith.constant 0 : index
    %c0_80 = arith.constant 0 : index
    %228 = vector.load %arg5[%c0_79, %c0_80] : memref<32x128xf32, #tpu.memory_space<vmem>>, vector<32x128xf32>
    %cst_81 = arith.constant dense<0.000000e+00> : vector<8x128xf32>
    %229 = tpu.matmul %222, %228, %cst_81 {dimension_numbers = #tpu.dot_dimension_numbers<[1], [0], [0], [1], [0, 0, 1, 1], [], []>} : vector<8x32xf32>, vector<32x128xf32>, vector<8x128xf32> -> vector<8x128xf32>
    %230 = arith.addf %227, %229 : vector<8x128xf32>
    %231 = math.tanh %230 : vector<8x128xf32>
    %232 = arith.negf %230 : vector<8x128xf32>
    %233 = math.exp %232 : vector<8x128xf32>
    %cst_82 = arith.constant 1.000000e+00 : f32
    %234 = vector.broadcast %cst_82 : f32 to vector<8x128xf32>
    %235 = arith.addf %234, %233 : vector<8x128xf32>
    %236 = arith.divf %234, %235 : vector<8x128xf32>
    %237 = arith.select %5, %231, %236 : vector<8x128xi1>, vector<8x128xf32>
    %238 = vector.extract_strided_slice %237 {offsets = [0, 0], sizes = [8, 32], strides = [1, 1]} : vector<8x128xf32> to vector<8x32xf32>
    %239 = vector.extract_strided_slice %237 {offsets = [0, 32], sizes = [8, 32], strides = [1, 1]} : vector<8x128xf32> to vector<8x32xf32>
    %240 = vector.extract_strided_slice %237 {offsets = [0, 64], sizes = [8, 32], strides = [1, 1]} : vector<8x128xf32> to vector<8x32xf32>
    %241 = vector.extract_strided_slice %237 {offsets = [0, 96], sizes = [8, 32], strides = [1, 1]} : vector<8x128xf32> to vector<8x32xf32>
    %242 = arith.mulf %239, %223 : vector<8x32xf32>
    %243 = arith.mulf %238, %240 : vector<8x32xf32>
    %244 = arith.addf %242, %243 : vector<8x32xf32>
    %245 = math.tanh %244 : vector<8x32xf32>
    %246 = arith.mulf %241, %245 : vector<8x32xf32>
    %c1_i32_83 = arith.constant 1 : i32
    %c8_i32_84 = arith.constant 8 : i32
    %247 = arith.muli %c1_i32_83, %c8_i32_84 : i32
    %248 = tpu.assume_multiple %247, 8 : i32
    %249 = arith.index_cast %248 : i32 to index
    %c0_85 = arith.constant 0 : index
    %250 = vector.load %arg10[%249, %c0_85] : memref<64x128xf32, #tpu.memory_space<vmem>>, vector<8x128xf32>
    %c0_86 = arith.constant 0 : index
    %c0_87 = arith.constant 0 : index
    %251 = vector.load %arg5[%c0_86, %c0_87] : memref<32x128xf32, #tpu.memory_space<vmem>>, vector<32x128xf32>
    %cst_88 = arith.constant dense<0.000000e+00> : vector<8x128xf32>
    %252 = tpu.matmul %246, %251, %cst_88 {dimension_numbers = #tpu.dot_dimension_numbers<[1], [0], [0], [1], [0, 0, 1, 1], [], []>} : vector<8x32xf32>, vector<32x128xf32>, vector<8x128xf32> -> vector<8x128xf32>
    %253 = arith.addf %250, %252 : vector<8x128xf32>
    %254 = math.tanh %253 : vector<8x128xf32>
    %255 = arith.negf %253 : vector<8x128xf32>
    %256 = math.exp %255 : vector<8x128xf32>
    %cst_89 = arith.constant 1.000000e+00 : f32
    %257 = vector.broadcast %cst_89 : f32 to vector<8x128xf32>
    %258 = arith.addf %257, %256 : vector<8x128xf32>
    %259 = arith.divf %257, %258 : vector<8x128xf32>
    %260 = arith.select %5, %254, %259 : vector<8x128xi1>, vector<8x128xf32>
    %261 = vector.extract_strided_slice %260 {offsets = [0, 0], sizes = [8, 32], strides = [1, 1]} : vector<8x128xf32> to vector<8x32xf32>
    %262 = vector.extract_strided_slice %260 {offsets = [0, 32], sizes = [8, 32], strides = [1, 1]} : vector<8x128xf32> to vector<8x32xf32>
    %263 = vector.extract_strided_slice %260 {offsets = [0, 64], sizes = [8, 32], strides = [1, 1]} : vector<8x128xf32> to vector<8x32xf32>
    %264 = vector.extract_strided_slice %260 {offsets = [0, 96], sizes = [8, 32], strides = [1, 1]} : vector<8x128xf32> to vector<8x32xf32>
    %265 = arith.mulf %262, %244 : vector<8x32xf32>
    %266 = arith.mulf %261, %263 : vector<8x32xf32>
    %267 = arith.addf %265, %266 : vector<8x32xf32>
    %268 = math.tanh %267 : vector<8x32xf32>
    %269 = arith.mulf %264, %268 : vector<8x32xf32>
    %c2_i32_90 = arith.constant 2 : i32
    %c8_i32_91 = arith.constant 8 : i32
    %270 = arith.muli %c2_i32_90, %c8_i32_91 : i32
    %271 = tpu.assume_multiple %270, 8 : i32
    %272 = arith.index_cast %271 : i32 to index
    %c0_92 = arith.constant 0 : index
    %273 = vector.load %arg10[%272, %c0_92] : memref<64x128xf32, #tpu.memory_space<vmem>>, vector<8x128xf32>
    %c0_93 = arith.constant 0 : index
    %c0_94 = arith.constant 0 : index
    %274 = vector.load %arg5[%c0_93, %c0_94] : memref<32x128xf32, #tpu.memory_space<vmem>>, vector<32x128xf32>
    %cst_95 = arith.constant dense<0.000000e+00> : vector<8x128xf32>
    %275 = tpu.matmul %269, %274, %cst_95 {dimension_numbers = #tpu.dot_dimension_numbers<[1], [0], [0], [1], [0, 0, 1, 1], [], []>} : vector<8x32xf32>, vector<32x128xf32>, vector<8x128xf32> -> vector<8x128xf32>
    %276 = arith.addf %273, %275 : vector<8x128xf32>
    %277 = math.tanh %276 : vector<8x128xf32>
    %278 = arith.negf %276 : vector<8x128xf32>
    %279 = math.exp %278 : vector<8x128xf32>
    %cst_96 = arith.constant 1.000000e+00 : f32
    %280 = vector.broadcast %cst_96 : f32 to vector<8x128xf32>
    %281 = arith.addf %280, %279 : vector<8x128xf32>
    %282 = arith.divf %280, %281 : vector<8x128xf32>
    %283 = arith.select %5, %277, %282 : vector<8x128xi1>, vector<8x128xf32>
    %284 = vector.extract_strided_slice %283 {offsets = [0, 0], sizes = [8, 32], strides = [1, 1]} : vector<8x128xf32> to vector<8x32xf32>
    %285 = vector.extract_strided_slice %283 {offsets = [0, 32], sizes = [8, 32], strides = [1, 1]} : vector<8x128xf32> to vector<8x32xf32>
    %286 = vector.extract_strided_slice %283 {offsets = [0, 64], sizes = [8, 32], strides = [1, 1]} : vector<8x128xf32> to vector<8x32xf32>
    %287 = vector.extract_strided_slice %283 {offsets = [0, 96], sizes = [8, 32], strides = [1, 1]} : vector<8x128xf32> to vector<8x32xf32>
    %288 = arith.mulf %285, %267 : vector<8x32xf32>
    %289 = arith.mulf %284, %286 : vector<8x32xf32>
    %290 = arith.addf %288, %289 : vector<8x32xf32>
    %291 = math.tanh %290 : vector<8x32xf32>
    %292 = arith.mulf %287, %291 : vector<8x32xf32>
    %c3_i32_97 = arith.constant 3 : i32
    %c8_i32_98 = arith.constant 8 : i32
    %293 = arith.muli %c3_i32_97, %c8_i32_98 : i32
    %294 = tpu.assume_multiple %293, 8 : i32
    %295 = arith.index_cast %294 : i32 to index
    %c0_99 = arith.constant 0 : index
    %296 = vector.load %arg10[%295, %c0_99] : memref<64x128xf32, #tpu.memory_space<vmem>>, vector<8x128xf32>
    %c0_100 = arith.constant 0 : index
    %c0_101 = arith.constant 0 : index
    %297 = vector.load %arg5[%c0_100, %c0_101] : memref<32x128xf32, #tpu.memory_space<vmem>>, vector<32x128xf32>
    %cst_102 = arith.constant dense<0.000000e+00> : vector<8x128xf32>
    %298 = tpu.matmul %292, %297, %cst_102 {dimension_numbers = #tpu.dot_dimension_numbers<[1], [0], [0], [1], [0, 0, 1, 1], [], []>} : vector<8x32xf32>, vector<32x128xf32>, vector<8x128xf32> -> vector<8x128xf32>
    %299 = arith.addf %296, %298 : vector<8x128xf32>
    %300 = math.tanh %299 : vector<8x128xf32>
    %301 = arith.negf %299 : vector<8x128xf32>
    %302 = math.exp %301 : vector<8x128xf32>
    %cst_103 = arith.constant 1.000000e+00 : f32
    %303 = vector.broadcast %cst_103 : f32 to vector<8x128xf32>
    %304 = arith.addf %303, %302 : vector<8x128xf32>
    %305 = arith.divf %303, %304 : vector<8x128xf32>
    %306 = arith.select %5, %300, %305 : vector<8x128xi1>, vector<8x128xf32>
    %307 = vector.extract_strided_slice %306 {offsets = [0, 0], sizes = [8, 32], strides = [1, 1]} : vector<8x128xf32> to vector<8x32xf32>
    %308 = vector.extract_strided_slice %306 {offsets = [0, 32], sizes = [8, 32], strides = [1, 1]} : vector<8x128xf32> to vector<8x32xf32>
    %309 = vector.extract_strided_slice %306 {offsets = [0, 64], sizes = [8, 32], strides = [1, 1]} : vector<8x128xf32> to vector<8x32xf32>
    %310 = vector.extract_strided_slice %306 {offsets = [0, 96], sizes = [8, 32], strides = [1, 1]} : vector<8x128xf32> to vector<8x32xf32>
    %311 = arith.mulf %308, %290 : vector<8x32xf32>
    %312 = arith.mulf %307, %309 : vector<8x32xf32>
    %313 = arith.addf %311, %312 : vector<8x32xf32>
    %314 = math.tanh %313 : vector<8x32xf32>
    %315 = arith.mulf %310, %314 : vector<8x32xf32>
    %c4_i32_104 = arith.constant 4 : i32
    %c8_i32_105 = arith.constant 8 : i32
    %316 = arith.muli %c4_i32_104, %c8_i32_105 : i32
    %317 = tpu.assume_multiple %316, 8 : i32
    %318 = arith.index_cast %317 : i32 to index
    %c0_106 = arith.constant 0 : index
    %319 = vector.load %arg10[%318, %c0_106] : memref<64x128xf32, #tpu.memory_space<vmem>>, vector<8x128xf32>
    %c0_107 = arith.constant 0 : index
    %c0_108 = arith.constant 0 : index
    %320 = vector.load %arg5[%c0_107, %c0_108] : memref<32x128xf32, #tpu.memory_space<vmem>>, vector<32x128xf32>
    %cst_109 = arith.constant dense<0.000000e+00> : vector<8x128xf32>
    %321 = tpu.matmul %315, %320, %cst_109 {dimension_numbers = #tpu.dot_dimension_numbers<[1], [0], [0], [1], [0, 0, 1, 1], [], []>} : vector<8x32xf32>, vector<32x128xf32>, vector<8x128xf32> -> vector<8x128xf32>
    %322 = arith.addf %319, %321 : vector<8x128xf32>
    %323 = math.tanh %322 : vector<8x128xf32>
    %324 = arith.negf %322 : vector<8x128xf32>
    %325 = math.exp %324 : vector<8x128xf32>
    %cst_110 = arith.constant 1.000000e+00 : f32
    %326 = vector.broadcast %cst_110 : f32 to vector<8x128xf32>
    %327 = arith.addf %326, %325 : vector<8x128xf32>
    %328 = arith.divf %326, %327 : vector<8x128xf32>
    %329 = arith.select %5, %323, %328 : vector<8x128xi1>, vector<8x128xf32>
    %330 = vector.extract_strided_slice %329 {offsets = [0, 0], sizes = [8, 32], strides = [1, 1]} : vector<8x128xf32> to vector<8x32xf32>
    %331 = vector.extract_strided_slice %329 {offsets = [0, 32], sizes = [8, 32], strides = [1, 1]} : vector<8x128xf32> to vector<8x32xf32>
    %332 = vector.extract_strided_slice %329 {offsets = [0, 64], sizes = [8, 32], strides = [1, 1]} : vector<8x128xf32> to vector<8x32xf32>
    %333 = vector.extract_strided_slice %329 {offsets = [0, 96], sizes = [8, 32], strides = [1, 1]} : vector<8x128xf32> to vector<8x32xf32>
    %334 = arith.mulf %331, %313 : vector<8x32xf32>
    %335 = arith.mulf %330, %332 : vector<8x32xf32>
    %336 = arith.addf %334, %335 : vector<8x32xf32>
    %337 = math.tanh %336 : vector<8x32xf32>
    %338 = arith.mulf %333, %337 : vector<8x32xf32>
    %c5_i32_111 = arith.constant 5 : i32
    %c8_i32_112 = arith.constant 8 : i32
    %339 = arith.muli %c5_i32_111, %c8_i32_112 : i32
    %340 = tpu.assume_multiple %339, 8 : i32
    %341 = arith.index_cast %340 : i32 to index
    %c0_113 = arith.constant 0 : index
    %342 = vector.load %arg10[%341, %c0_113] : memref<64x128xf32, #tpu.memory_space<vmem>>, vector<8x128xf32>
    %c0_114 = arith.constant 0 : index
    %c0_115 = arith.constant 0 : index
    %343 = vector.load %arg5[%c0_114, %c0_115] : memref<32x128xf32, #tpu.memory_space<vmem>>, vector<32x128xf32>
    %cst_116 = arith.constant dense<0.000000e+00> : vector<8x128xf32>
    %344 = tpu.matmul %338, %343, %cst_116 {dimension_numbers = #tpu.dot_dimension_numbers<[1], [0], [0], [1], [0, 0, 1, 1], [], []>} : vector<8x32xf32>, vector<32x128xf32>, vector<8x128xf32> -> vector<8x128xf32>
    %345 = arith.addf %342, %344 : vector<8x128xf32>
    %346 = math.tanh %345 : vector<8x128xf32>
    %347 = arith.negf %345 : vector<8x128xf32>
    %348 = math.exp %347 : vector<8x128xf32>
    %cst_117 = arith.constant 1.000000e+00 : f32
    %349 = vector.broadcast %cst_117 : f32 to vector<8x128xf32>
    %350 = arith.addf %349, %348 : vector<8x128xf32>
    %351 = arith.divf %349, %350 : vector<8x128xf32>
    %352 = arith.select %5, %346, %351 : vector<8x128xi1>, vector<8x128xf32>
    %353 = vector.extract_strided_slice %352 {offsets = [0, 0], sizes = [8, 32], strides = [1, 1]} : vector<8x128xf32> to vector<8x32xf32>
    %354 = vector.extract_strided_slice %352 {offsets = [0, 32], sizes = [8, 32], strides = [1, 1]} : vector<8x128xf32> to vector<8x32xf32>
    %355 = vector.extract_strided_slice %352 {offsets = [0, 64], sizes = [8, 32], strides = [1, 1]} : vector<8x128xf32> to vector<8x32xf32>
    %356 = vector.extract_strided_slice %352 {offsets = [0, 96], sizes = [8, 32], strides = [1, 1]} : vector<8x128xf32> to vector<8x32xf32>
    %357 = arith.mulf %354, %336 : vector<8x32xf32>
    %358 = arith.mulf %353, %355 : vector<8x32xf32>
    %359 = arith.addf %357, %358 : vector<8x32xf32>
    %360 = math.tanh %359 : vector<8x32xf32>
    %361 = arith.mulf %356, %360 : vector<8x32xf32>
    %c6_i32_118 = arith.constant 6 : i32
    %c8_i32_119 = arith.constant 8 : i32
    %362 = arith.muli %c6_i32_118, %c8_i32_119 : i32
    %363 = tpu.assume_multiple %362, 8 : i32
    %364 = arith.index_cast %363 : i32 to index
    %c0_120 = arith.constant 0 : index
    %365 = vector.load %arg10[%364, %c0_120] : memref<64x128xf32, #tpu.memory_space<vmem>>, vector<8x128xf32>
    %c0_121 = arith.constant 0 : index
    %c0_122 = arith.constant 0 : index
    %366 = vector.load %arg5[%c0_121, %c0_122] : memref<32x128xf32, #tpu.memory_space<vmem>>, vector<32x128xf32>
    %cst_123 = arith.constant dense<0.000000e+00> : vector<8x128xf32>
    %367 = tpu.matmul %361, %366, %cst_123 {dimension_numbers = #tpu.dot_dimension_numbers<[1], [0], [0], [1], [0, 0, 1, 1], [], []>} : vector<8x32xf32>, vector<32x128xf32>, vector<8x128xf32> -> vector<8x128xf32>
    %368 = arith.addf %365, %367 : vector<8x128xf32>
    %369 = math.tanh %368 : vector<8x128xf32>
    %370 = arith.negf %368 : vector<8x128xf32>
    %371 = math.exp %370 : vector<8x128xf32>
    %cst_124 = arith.constant 1.000000e+00 : f32
    %372 = vector.broadcast %cst_124 : f32 to vector<8x128xf32>
    %373 = arith.addf %372, %371 : vector<8x128xf32>
    %374 = arith.divf %372, %373 : vector<8x128xf32>
    %375 = arith.select %5, %369, %374 : vector<8x128xi1>, vector<8x128xf32>
    %376 = vector.extract_strided_slice %375 {offsets = [0, 0], sizes = [8, 32], strides = [1, 1]} : vector<8x128xf32> to vector<8x32xf32>
    %377 = vector.extract_strided_slice %375 {offsets = [0, 32], sizes = [8, 32], strides = [1, 1]} : vector<8x128xf32> to vector<8x32xf32>
    %378 = vector.extract_strided_slice %375 {offsets = [0, 64], sizes = [8, 32], strides = [1, 1]} : vector<8x128xf32> to vector<8x32xf32>
    %379 = vector.extract_strided_slice %375 {offsets = [0, 96], sizes = [8, 32], strides = [1, 1]} : vector<8x128xf32> to vector<8x32xf32>
    %380 = arith.mulf %377, %359 : vector<8x32xf32>
    %381 = arith.mulf %376, %378 : vector<8x32xf32>
    %382 = arith.addf %380, %381 : vector<8x32xf32>
    %383 = math.tanh %382 : vector<8x32xf32>
    %384 = arith.mulf %379, %383 : vector<8x32xf32>
    %c7_i32_125 = arith.constant 7 : i32
    %c8_i32_126 = arith.constant 8 : i32
    %385 = arith.muli %c7_i32_125, %c8_i32_126 : i32
    %386 = tpu.assume_multiple %385, 8 : i32
    %387 = arith.index_cast %386 : i32 to index
    %c0_127 = arith.constant 0 : index
    %388 = vector.load %arg10[%387, %c0_127] : memref<64x128xf32, #tpu.memory_space<vmem>>, vector<8x128xf32>
    %c0_128 = arith.constant 0 : index
    %c0_129 = arith.constant 0 : index
    %389 = vector.load %arg5[%c0_128, %c0_129] : memref<32x128xf32, #tpu.memory_space<vmem>>, vector<32x128xf32>
    %cst_130 = arith.constant dense<0.000000e+00> : vector<8x128xf32>
    %390 = tpu.matmul %384, %389, %cst_130 {dimension_numbers = #tpu.dot_dimension_numbers<[1], [0], [0], [1], [0, 0, 1, 1], [], []>} : vector<8x32xf32>, vector<32x128xf32>, vector<8x128xf32> -> vector<8x128xf32>
    %391 = arith.addf %388, %390 : vector<8x128xf32>
    %392 = math.tanh %391 : vector<8x128xf32>
    %393 = arith.negf %391 : vector<8x128xf32>
    %394 = math.exp %393 : vector<8x128xf32>
    %cst_131 = arith.constant 1.000000e+00 : f32
    %395 = vector.broadcast %cst_131 : f32 to vector<8x128xf32>
    %396 = arith.addf %395, %394 : vector<8x128xf32>
    %397 = arith.divf %395, %396 : vector<8x128xf32>
    %398 = arith.select %5, %392, %397 : vector<8x128xi1>, vector<8x128xf32>
    %399 = vector.extract_strided_slice %398 {offsets = [0, 0], sizes = [8, 32], strides = [1, 1]} : vector<8x128xf32> to vector<8x32xf32>
    %400 = vector.extract_strided_slice %398 {offsets = [0, 32], sizes = [8, 32], strides = [1, 1]} : vector<8x128xf32> to vector<8x32xf32>
    %401 = vector.extract_strided_slice %398 {offsets = [0, 64], sizes = [8, 32], strides = [1, 1]} : vector<8x128xf32> to vector<8x32xf32>
    %402 = vector.extract_strided_slice %398 {offsets = [0, 96], sizes = [8, 32], strides = [1, 1]} : vector<8x128xf32> to vector<8x32xf32>
    %403 = arith.mulf %400, %382 : vector<8x32xf32>
    %404 = arith.mulf %399, %401 : vector<8x32xf32>
    %405 = arith.addf %403, %404 : vector<8x32xf32>
    %406 = math.tanh %405 : vector<8x32xf32>
    %407 = arith.mulf %402, %406 : vector<8x32xf32>
    %c8_i32_132 = arith.constant 8 : i32
    %c0_133 = arith.constant 0 : index
    %c0_134 = arith.constant 0 : index
    %408 = vector.load %arg7[%c0_133, %c0_134] : memref<32x128xf32, #tpu.memory_space<vmem>>, vector<32x128xf32>
    %cst_135 = arith.constant dense<0.000000e+00> : vector<8x128xf32>
    %409 = tpu.matmul %407, %408, %cst_135 {dimension_numbers = #tpu.dot_dimension_numbers<[1], [0], [0], [1], [0, 0, 1, 1], [], []>} : vector<8x32xf32>, vector<32x128xf32>, vector<8x128xf32> -> vector<8x128xf32>
    %c0_136 = arith.constant 0 : index
    %c0_137 = arith.constant 0 : index
    %410 = vector.load %arg8[%c0_136, %c0_137] : memref<1x128xf32, #tpu.memory_space<vmem>>, vector<1x128xf32>
    %411 = vector.broadcast %410 : vector<1x128xf32> to vector<8x128xf32>
    %412 = arith.addf %409, %411 : vector<8x128xf32>
    %c0_138 = arith.constant 0 : index
    %c0_139 = arith.constant 0 : index
    %413 = vector.load %arg9[%c0_138, %c0_139] : memref<8x128xf32, #tpu.memory_space<vmem>>, vector<8x128xf32>
    tpu.vector_store %arg9[%c0_138, %c0_139], %412 {strides = array<i32>} : memref<8x128xf32, #tpu.memory_space<vmem>>, vector<8x128xf32>,
    return
  }
}

</mosaic_0001>

<llo_original>
// kernel: recurrent_nn_forward.1
$region0: #{recurrent_nn_forward.1}
  #allocation0 [shape = 'u32[]', space=smem, size = 0x4, offset = 0x4, fixed_abs, tag = 'smem constant byte address 0x4 - core index']
  #allocation1 [shape = 'u32[144,128]{1,0:T(1,128)}', space=vmem, size = 0x12000, scoped, tag = 'internal scratch']
  #allocation2 [shape = 'f32[64,128]{1,0:T(8,128)}', space=vmem, size = 0x8000, scoped, tag = 'scratch operand']
  #allocation3 [shape = 'f32[64,32]{1,0:T(8,128)}', space=vmem, size = 0x8000, scoped, tag = 'scratch operand']
  %s0 = inlined_call_operand.vmem [shape: f32[64,16], index: 0, kind: input, shape index: {}]
  %s1 = inlined_call_operand.vmem [shape: f32[16,128], index: 1, kind: input, shape index: {}]
  %s2 = inlined_call_operand.vmem [shape: f32[32,128], index: 2, kind: input, shape index: {}]
  %s3 = inlined_call_operand.vmem [shape: f32[1,128], index: 3, kind: input, shape index: {}]
  %s4 = inlined_call_operand.vmem [shape: f32[32,128], index: 4, kind: input, shape index: {}]
  %s5 = inlined_call_operand.vmem [shape: f32[32,128], index: 5, kind: input, shape index: {}]
  %s6 = inlined_call_operand.vmem [shape: f32[1,128], index: 6, kind: input, shape index: {}]
  %s7 = inlined_call_operand.vmem [shape: f32[32,128], index: 7, kind: input, shape index: {}]
  %s8 = inlined_call_operand.vmem [shape: f32[1,128], index: 8, kind: input, shape index: {}]
  %s9 = inlined_call_operand.vmem [shape: f32[8,128], index: 9, kind: output, shape index: {}]
  %s10 = sld [smem:[#allocation0]]
  $region46: #{recurrent_nn_forward.1} parent=0
    _
  %s12 = ssub.s32 1, %s10
  %s13 = scalar_select 0, %s12, %s10
  // Predicated region
  $region2: #{recurrent_nn_forward.1} parent=0 // pred_check
    _
  $region3: #{recurrent_nn_forward.1} parent=0 // pred_check_branch
    %15 = sbr.rel (0) target = $region5
  $region4: #{recurrent_nn_forward.1} parent=0 // pred_region
    _
  $region5: #{recurrent_nn_forward.1} parent=0 // pred_fallthru
    _
  // Predicated region
  $region6: #{recurrent_nn_forward.1} parent=0 // pred_check
    _
  $region7: #{recurrent_nn_forward.1} parent=0 // pred_check_branch
    %17 = sbr.rel (0) target = $region9
  $region8: #{recurrent_nn_forward.1} parent=0 // pred_region
    _
  $region9: #{recurrent_nn_forward.1} parent=0 // pred_fallthru
    _
  // Predicated region
  $region10: #{recurrent_nn_forward.1} parent=0 // pred_check
    _
  $region11: #{recurrent_nn_forward.1} parent=0 // pred_check_branch
    %19 = sbr.rel (0) target = $region13
  $region12: #{recurrent_nn_forward.1} parent=0 // pred_region
    _
  $region13: #{recurrent_nn_forward.1} parent=0 // pred_fallthru
    _
  // Predicated region
  $region14: #{recurrent_nn_forward.1} parent=0 // pred_check
    _
  $region15: #{recurrent_nn_forward.1} parent=0 // pred_check_branch
    %21 = sbr.rel (0) target = $region17
  $region16: #{recurrent_nn_forward.1} parent=0 // pred_region
    _
  $region17: #{recurrent_nn_forward.1} parent=0 // pred_fallthru
    _
  // Predicated region
  $region18: #{recurrent_nn_forward.1} parent=0 // pred_check
    _
  $region19: #{recurrent_nn_forward.1} parent=0 // pred_check_branch
    %23 = sbr.rel (0) target = $region21
  $region20: #{recurrent_nn_forward.1} parent=0 // pred_region
    _
  $region21: #{recurrent_nn_forward.1} parent=0 // pred_fallthru
    _
  // Predicated region
  $region22: #{recurrent_nn_forward.1} parent=0 // pred_check
    _
  $region23: #{recurrent_nn_forward.1} parent=0 // pred_check_branch
    %25 = sbr.rel (0) target = $region25
  $region24: #{recurrent_nn_forward.1} parent=0 // pred_region
    _
  $region25: #{recurrent_nn_forward.1} parent=0 // pred_fallthru
    _
  // Predicated region
  $region26: #{recurrent_nn_forward.1} parent=0 // pred_check
    _
  $region27: #{recurrent_nn_forward.1} parent=0 // pred_check_branch
    %27 = sbr.rel (0) target = $region29
  $region28: #{recurrent_nn_forward.1} parent=0 // pred_region
    _
  $region29: #{recurrent_nn_forward.1} parent=0 // pred_fallthru
    _
  // Predicated region
  $region30: #{recurrent_nn_forward.1} parent=0 // pred_check
    _
  $region31: #{recurrent_nn_forward.1} parent=0 // pred_check_branch
    %29 = sbr.rel (0) target = $region33
  $region32: #{recurrent_nn_forward.1} parent=0 // pred_region
    _
  $region33: #{recurrent_nn_forward.1} parent=0 // pred_fallthru
    _
  // Predicated region
  $region34: #{recurrent_nn_forward.1} parent=0 // pred_check
    _
  $region35: #{recurrent_nn_forward.1} parent=0 // pred_check_branch
    %31 = sbr.rel (0) target = $region37
  $region36: #{recurrent_nn_forward.1} parent=0 // pred_region
    _
  $region37: #{recurrent_nn_forward.1} parent=0 // pred_fallthru
    _
  %v32 = vlaneseq
  %v33 = vand.u32 %v32, 127
  %vm34 = vcmp.ge.s32.totalorder %v33, 64
  %vm35 = vcmp.lt.s32.totalorder %v33, 96
  %vm36 = vmand %vm34, %vm35
  %v37 = vld [vmem:[%s0] sm:$0xff]
  %v38 = vld [vmem:[%s0 + $0x8] sm:$0xff]
  %v39 = vld [vmem:[%s0 + $0x10] sm:$0xff]
  %v40 = vld [vmem:[%s0 + $0x18] sm:$0xff]
  %v41 = vld [vmem:[%s0 + $0x20] sm:$0xff]
  %v42 = vld [vmem:[%s0 + $0x28] sm:$0xff]
  %v43 = vld [vmem:[%s0 + $0x30] sm:$0xff]
  %v44 = vld [vmem:[%s0 + $0x38] sm:$0xff]
  %v45 = vld [vmem:[%s1] sm:$0xff]
  %v46 = vld [vmem:[%s1 + $0x8] sm:$0xff]
  %v47 = vld [vmem:[%s3] sm:$0x1]
  %v49 = vlaneseq
  %v50 = vshrl.u32 %v49, 7
  %v51 = vsub.s32 0, %v50
  %v52 = vrot.slane %v47, %v51
  %vm54 = vcmask 130048
  %v56 = vsel %vm54, %v37, 0
  %v59 = vsel %vm54, %v38, 0
  %v62 = vsel %vm54, %v39, 0
  %v65 = vsel %vm54, %v40, 0
  %v68 = vsel %vm54, %v41, 0
  %v71 = vsel %vm54, %v42, 0
  %v74 = vsel %vm54, %v43, 0
  %v77 = vsel %vm54, %v44, 0
  %79 = vmatprep.subr.mxu0 0.0
  %80 = vmatpush1.msra.mxu0 %v45
  %81 = vmatprep.subr.mxu0 0.0
  %82 = vmatpush1.msra.mxu0 %v46
  %83 = vmatprep.subr.mxu0 0.0
  %84 = vmatpush1.msra.mxu0 0.0
  %85 = vmatprep.subr.mxu0 0.0
  %86 = vmatpush1.msra.mxu0 0.0
  %87 = vmatprep.subr.mxu0 0.0
  %88 = vmatpush1.msra.mxu0 0.0
  %89 = vmatprep.subr.mxu0 0.0
  %90 = vmatpush1.msra.mxu0 0.0
  %91 = vmatprep.subr.mxu0 0.0
  %92 = vmatpush1.msra.mxu0 0.0
  %93 = vmatprep.subr.mxu0 0.0
  %94 = vmatpush1.msra.mxu0 0.0
  %95 = vmatprep.subr.mxu0 0.0
  %96 = vmatpush1.msra.mxu0 0.0
  %97 = vmatprep.subr.mxu0 0.0
  %98 = vmatpush1.msra.mxu0 0.0
  %99 = vmatprep.subr.mxu0 0.0
  %100 = vmatpush1.msra.mxu0 0.0
  %101 = vmatprep.subr.mxu0 0.0
  %102 = vmatpush1.msra.mxu0 0.0
  %103 = vmatprep.subr.mxu0 0.0
  %104 = vmatpush1.msra.mxu0 0.0
  %105 = vmatprep.subr.mxu0 0.0
  %106 = vmatpush1.msra.mxu0 0.0
  %107 = vmatprep.subr.mxu0 0.0
  %108 = vmatpush1.msra.mxu0 0.0
  %109 = vmatprep.subr.mxu0 0.0
  %110 = vmatpush1.msra.mxu0 0.0
  %111 = vmatprep.subr.mxu0 0.0
  %112 = vmatpush1.msra.mxu0 0.0
  %113 = vmatprep.subr.mxu0 0.0
  %114 = vmatpush1.msra.mxu0 0.0
  %115 = vmatprep.subr.mxu0 0.0
  %116 = vmatpush1.msra.mxu0 0.0
  %117 = vmatprep.subr.mxu0 0.0
  %118 = vmatpush1.msra.mxu0 0.0
  %119 = vmatprep.subr.mxu0 0.0
  %120 = vmatpush1.msra.mxu0 0.0
  %121 = vmatprep.subr.mxu0 0.0
  %122 = vmatpush1.msra.mxu0 0.0
  %123 = vmatprep.subr.mxu0 0.0
  %124 = vmatpush1.msra.mxu0 0.0
  %125 = vmatprep.subr.mxu0 0.0
  %126 = vmatpush1.msra.mxu0 0.0
  %127 = vmatprep.subr.mxu0 0.0
  %128 = vmatpush1.msra.mxu0 0.0
  %129 = vmatprep.subr.mxu0 0.0
  %130 = vmatpush1.msra.mxu0 0.0
  %131 = vmatprep.subr.mxu0 0.0
  %132 = vmatpush1.msra.mxu0 0.0
  %133 = vmatprep.subr.mxu0 0.0
  %134 = vmatpush1.msra.mxu0 0.0
  %135 = vmatprep.subr.mxu0 0.0
  %136 = vmatpush1.msra.mxu0 0.0
  %137 = vmatprep.subr.mxu0 0.0
  %138 = vmatpush1.msra.mxu0 0.0
  %139 = vmatprep.subr.mxu0 0.0
  %140 = vmatpush1.msra.mxu0 0.0
  %141 = vmatprep.subr.mxu0 0.0
  %142 = vmatpush1.msra.mxu0 0.0
  %143 = vmatprep.mubr.f32.mxu0 0.0
  %144 = vmatmul.mubr.f32.gmra.mrb[0].mxu0 %v56
  %v145 = vpop.f32.mrb[0].mxu0
  %v146 = vadd.f32 %v52, %v145
  %v147 = vpop.f32.mrb[0].mxu0
  %148 = vmatprep.mubr.f32.mxu0 0.0
  %149 = vmatmul.mubr.f32.gmra.mrb[0].mxu0 %v59
  %v150 = vpop.f32.mrb[0].mxu0
  %v151 = vadd.f32 %v52, %v150
  %v152 = vpop.f32.mrb[0].mxu0
  %153 = vmatprep.mubr.f32.mxu0 0.0
  %154 = vmatmul.mubr.f32.gmra.mrb[0].mxu0 %v62
  %v155 = vpop.f32.mrb[0].mxu0
  %v156 = vadd.f32 %v52, %v155
  %v157 = vpop.f32.mrb[0].mxu0
  %158 = vmatprep.mubr.f32.mxu0 0.0
  %159 = vmatmul.mubr.f32.gmra.mrb[0].mxu0 %v65
  %v160 = vpop.f32.mrb[0].mxu0
  %v161 = vadd.f32 %v52, %v160
  %v162 = vpop.f32.mrb[0].mxu0
  %163 = vmatprep.mubr.f32.mxu0 0.0
  %164 = vmatmul.mubr.f32.gmra.mrb[0].mxu0 %v68
  %v165 = vpop.f32.mrb[0].mxu0
  %v166 = vadd.f32 %v52, %v165
  %v167 = vpop.f32.mrb[0].mxu0
  %168 = vmatprep.mubr.f32.mxu0 0.0
  %169 = vmatmul.mubr.f32.gmra.mrb[0].mxu0 %v71
  %v170 = vpop.f32.mrb[0].mxu0
  %v171 = vadd.f32 %v52, %v170
  %v172 = vpop.f32.mrb[0].mxu0
  %173 = vmatprep.mubr.f32.mxu0 0.0
  %174 = vmatmul.mubr.f32.gmra.mrb[0].mxu0 %v74
  %v175 = vpop.f32.mrb[0].mxu0
  %v176 = vadd.f32 %v52, %v175
  %v177 = vpop.f32.mrb[0].mxu0
  %178 = vmatprep.mubr.f32.mxu0 0.0
  %179 = vmatmul.mubr.f32.gmra.mrb[0].mxu0 %v77
  %v180 = vpop.f32.mrb[0].mxu0
  %v181 = vadd.f32 %v52, %v180
  %v182 = vpop.f32.mrb[0].mxu0
  %183 = vdwg.mxu0
  %184 = vst [vmem:[#allocation2] sm:$0xff] %v146
  %185 = vst [vmem:[#allocation2 + $0x8] sm:$0xff] %v151
  %186 = vst [vmem:[#allocation2 + $0x10] sm:$0xff] %v156
  %187 = vst [vmem:[#allocation2 + $0x18] sm:$0xff] %v161
  %188 = vst [vmem:[#allocation2 + $0x20] sm:$0xff] %v166
  %189 = vst [vmem:[#allocation2 + $0x28] sm:$0xff] %v171
  %190 = vst [vmem:[#allocation2 + $0x30] sm:$0xff] %v176
  %191 = vst [vmem:[#allocation2 + $0x38] sm:$0xff] %v181
  %v192 = vld [vmem:[#allocation2] sm:$0xff]
  %v193 = vld [vmem:[%s2] sm:$0xff]
  %v194 = vld [vmem:[%s2 + $0x8] sm:$0xff]
  %v195 = vld [vmem:[%s2 + $0x10] sm:$0xff]
  %v196 = vld [vmem:[%s2 + $0x18] sm:$0xff]
  %vm197 = vcmask 261120
  %v199 = vsel %vm197, 0.0, 0
  %201 = vmatprep.subr.mxu0 0.0
  %202 = vmatpush1.msra.mxu0 %v193
  %203 = vmatprep.subr.mxu0 0.0
  %204 = vmatpush1.msra.mxu0 %v194
  %205 = vmatprep.subr.mxu0 0.0
  %206 = vmatpush1.msra.mxu0 %v195
  %207 = vmatprep.subr.mxu0 0.0
  %208 = vmatpush1.msra.mxu0 %v196
  %209 = vmatprep.subr.mxu0 0.0
  %210 = vmatpush1.msra.mxu0 0.0
  %211 = vmatprep.subr.mxu0 0.0
  %212 = vmatpush1.msra.mxu0 0.0
  %213 = vmatprep.subr.mxu0 0.0
  %214 = vmatpush1.msra.mxu0 0.0
  %215 = vmatprep.subr.mxu0 0.0
  %216 = vmatpush1.msra.mxu0 0.0
  %217 = vmatprep.subr.mxu0 0.0
  %218 = vmatpush1.msra.mxu0 0.0
  %219 = vmatprep.subr.mxu0 0.0
  %220 = vmatpush1.msra.mxu0 0.0
  %221 = vmatprep.subr.mxu0 0.0
  %222 = vmatpush1.msra.mxu0 0.0
  %223 = vmatprep.subr.mxu0 0.0
  %224 = vmatpush1.msra.mxu0 0.0
  %225 = vmatprep.subr.mxu0 0.0
  %226 = vmatpush1.msra.mxu0 0.0
  %227 = vmatprep.subr.mxu0 0.0
  %228 = vmatpush1.msra.mxu0 0.0
  %229 = vmatprep.subr.mxu0 0.0
  %230 = vmatpush1.msra.mxu0 0.0
  %231 = vmatprep.subr.mxu0 0.0
  %232 = vmatpush1.msra.mxu0 0.0
  %233 = vmatprep.subr.mxu0 0.0
  %234 = vmatpush1.msra.mxu0 0.0
  %235 = vmatprep.subr.mxu0 0.0
  %236 = vmatpush1.msra.mxu0 0.0
  %237 = vmatprep.subr.mxu0 0.0
  %238 = vmatpush1.msra.mxu0 0.0
  %239 = vmatprep.subr.mxu0 0.0
  %240 = vmatpush1.msra.mxu0 0.0
  %241 = vmatprep.subr.mxu0 0.0
  %242 = vmatpush1.msra.mxu0 0.0
  %243 = vmatprep.subr.mxu0 0.0
  %244 = vmatpush1.msra.mxu0 0.0
  %245 = vmatprep.subr.mxu0 0.0
  %246 = vmatpush1.msra.mxu0 0.0
  %247 = vmatprep.subr.mxu0 0.0
  %248 = vmatpush1.msra.mxu0 0.0
  %249 = vmatprep.subr.mxu0 0.0
  %250 = vmatpush1.msra.mxu0 0.0
  %251 = vmatprep.subr.mxu0 0.0
  %252 = vmatpush1.msra.mxu0 0.0
  %253 = vmatprep.subr.mxu0 0.0
  %254 = vmatpush1.msra.mxu0 0.0
  %255 = vmatprep.subr.mxu0 0.0
  %256 = vmatpush1.msra.mxu0 0.0
  %257 = vmatprep.subr.mxu0 0.0
  %258 = vmatpush1.msra.mxu0 0.0
  %259 = vmatprep.subr.mxu0 0.0
  %260 = vmatpush1.msra.mxu0 0.0
  %261 = vmatprep.subr.mxu0 0.0
  %262 = vmatpush1.msra.mxu0 0.0
  %263 = vmatprep.subr.mxu0 0.0
  %264 = vmatpush1.msra.mxu0 0.0
  %265 = vmatprep.mubr.f32.mxu0 0.0
  %266 = vmatmul.mubr.f32.gmra.mrb[0].mxu0 %v199
  %v267 = vpop.f32.mrb[0].mxu0
  %v268 = vadd.f32 0.0, %v267
  %v269 = vpop.f32.mrb[0].mxu0
  %270 = vdwg.mxu0
  %v271 = vadd.f32 %v192, %v268
  %v272 = vtanh.pop %v271
  %v273 = vxor.u32 %v271, 2147483648
  %v274 = vmul.f32 %v273, 1.442695
  %v275 = vpow.pop %v274
  %v276 = vadd.f32 %v275, 1.0
  %v277 = vrcp.pop %v276
  %v278 = vmul.f32 1.0, %v277
  %v279 = vsel %vm36, %v272, %v278
  %v280 = vmul.f32 %v279, 0.0
  %282 = vrot.lane.b32.xlu0 %v279, 64
  %v283 = vpop.permute.xlu0 %282
  %v285 = vmul.f32 %v279, %v283
  %287 = vrot.lane.b32.xlu0 %v285, 32
  %v288 = vpop.permute.xlu0 %287
  %v290 = vadd.f32 %v280, %v288
  %v291 = vtanh.pop %v290
  %293 = vrot.lane.b32.xlu0 %v291, 64
  %v294 = vpop.permute.xlu0 %293
  %v296 = vmul.f32 %v279, %v294
  %298 = vrot.lane.b32.xlu0 %v296, 32
  %v299 = vpop.permute.xlu0 %298
  %301 = vst.msk [vmem:[#allocation3] sm:$0xff] %vm197, %v299
  %s302 = scalar_lea.vmem [#allocation2], 8
  %v303 = vld [vmem:[%s302] sm:$0xff]
  %v304 = vld [vmem:[%s2] sm:$0xff]
  %v305 = vld [vmem:[%s2 + $0x8] sm:$0xff]
  %v306 = vld [vmem:[%s2 + $0x10] sm:$0xff]
  %v307 = vld [vmem:[%s2 + $0x18] sm:$0xff]
  %v308 = vsel %vm197, %v299, 0
  %310 = vmatprep.subr.mxu0 0.0
  %311 = vmatpush1.msra.mxu0 %v304
  %312 = vmatprep.subr.mxu0 0.0
  %313 = vmatpush1.msra.mxu0 %v305
  %314 = vmatprep.subr.mxu0 0.0
  %315 = vmatpush1.msra.mxu0 %v306
  %316 = vmatprep.subr.mxu0 0.0
  %317 = vmatpush1.msra.mxu0 %v307
  %318 = vmatprep.subr.mxu0 0.0
  %319 = vmatpush1.msra.mxu0 0.0
  %320 = vmatprep.subr.mxu0 0.0
  %321 = vmatpush1.msra.mxu0 0.0
  %322 = vmatprep.subr.mxu0 0.0
  %323 = vmatpush1.msra.mxu0 0.0
  %324 = vmatprep.subr.mxu0 0.0
  %325 = vmatpush1.msra.mxu0 0.0
  %326 = vmatprep.subr.mxu0 0.0
  %327 = vmatpush1.msra.mxu0 0.0
  %328 = vmatprep.subr.mxu0 0.0
  %329 = vmatpush1.msra.mxu0 0.0
  %330 = vmatprep.subr.mxu0 0.0
  %331 = vmatpush1.msra.mxu0 0.0
  %332 = vmatprep.subr.mxu0 0.0
  %333 = vmatpush1.msra.mxu0 0.0
  %334 = vmatprep.subr.mxu0 0.0
  %335 = vmatpush1.msra.mxu0 0.0
  %336 = vmatprep.subr.mxu0 0.0
  %337 = vmatpush1.msra.mxu0 0.0
  %338 = vmatprep.subr.mxu0 0.0
  %339 = vmatpush1.msra.mxu0 0.0
  %340 = vmatprep.subr.mxu0 0.0
  %341 = vmatpush1.msra.mxu0 0.0
  %342 = vmatprep.subr.mxu0 0.0
  %343 = vmatpush1.msra.mxu0 0.0
  %344 = vmatprep.subr.mxu0 0.0
  %345 = vmatpush1.msra.mxu0 0.0
  %346 = vmatprep.subr.mxu0 0.0
  %347 = vmatpush1.msra.mxu0 0.0
  %348 = vmatprep.subr.mxu0 0.0
  %349 = vmatpush1.msra.mxu0 0.0
  %350 = vmatprep.subr.mxu0 0.0
  %351 = vmatpush1.msra.mxu0 0.0
  %352 = vmatprep.subr.mxu0 0.0
  %353 = vmatpush1.msra.mxu0 0.0
  %354 = vmatprep.subr.mxu0 0.0
  %355 = vmatpush1.msra.mxu0 0.0
  %356 = vmatprep.subr.mxu0 0.0
  %357 = vmatpush1.msra.mxu0 0.0
  %358 = vmatprep.subr.mxu0 0.0
  %359 = vmatpush1.msra.mxu0 0.0
  %360 = vmatprep.subr.mxu0 0.0
  %361 = vmatpush1.msra.mxu0 0.0
  %362 = vmatprep.subr.mxu0 0.0
  %363 = vmatpush1.msra.mxu0 0.0
  %364 = vmatprep.subr.mxu0 0.0
  %365 = vmatpush1.msra.mxu0 0.0
  %366 = vmatprep.subr.mxu0 0.0
  %367 = vmatpush1.msra.mxu0 0.0
  %368 = vmatprep.subr.mxu0 0.0
  %369 = vmatpush1.msra.mxu0 0.0
  %370 = vmatprep.subr.mxu0 0.0
  %371 = vmatpush1.msra.mxu0 0.0
  %372 = vmatprep.subr.mxu0 0.0
  %373 = vmatpush1.msra.mxu0 0.0
  %374 = vmatprep.mubr.f32.mxu0 0.0
  %375 = vmatmul.mubr.f32.gmra.mrb[0].mxu0 %v308
  %v376 = vpop.f32.mrb[0].mxu0
  %v377 = vadd.f32 0.0, %v376
  %v378 = vpop.f32.mrb[0].mxu0
  %379 = vdwg.mxu0
  %v380 = vadd.f32 %v303, %v377
  %v381 = vtanh.pop %v380
  %v382 = vxor.u32 %v380, 2147483648
  %v383 = vmul.f32 %v382, 1.442695
  %v384 = vpow.pop %v383
  %v385 = vadd.f32 %v384, 1.0
  %v386 = vrcp.pop %v385
  %v387 = vmul.f32 1.0, %v386
  %v388 = vsel %vm36, %v381, %v387
  %v389 = vmul.f32 %v388, %v290
  %391 = vrot.lane.b32.xlu0 %v388, 64
  %v392 = vpop.permute.xlu0 %391
  %v394 = vmul.f32 %v388, %v392
  %396 = vrot.lane.b32.xlu0 %v394, 32
  %v397 = vpop.permute.xlu0 %396
  %v399 = vadd.f32 %v389, %v397
  %v400 = vtanh.pop %v399
  %402 = vrot.lane.b32.xlu0 %v400, 64
  %v403 = vpop.permute.xlu0 %402
  %v405 = vmul.f32 %v388, %v403
  %407 = vrot.lane.b32.xlu0 %v405, 32
  %v408 = vpop.permute.xlu0 %407
  %s410 = scalar_lea.vmem [#allocation3], 8
  %411 = vst.msk [vmem:[%s410] sm:$0xff] %vm197, %v408
  %s412 = scalar_lea.vmem [#allocation2], 16
  %v413 = vld [vmem:[%s412] sm:$0xff]
  %v414 = vld [vmem:[%s2] sm:$0xff]
  %v415 = vld [vmem:[%s2 + $0x8] sm:$0xff]
  %v416 = vld [vmem:[%s2 + $0x10] sm:$0xff]
  %v417 = vld [vmem:[%s2 + $0x18] sm:$0xff]
  %v418 = vsel %vm197, %v408, 0
  %420 = vmatprep.subr.mxu0 0.0
  %421 = vmatpush1.msra.mxu0 %v414
  %422 = vmatprep.subr.mxu0 0.0
  %423 = vmatpush1.msra.mxu0 %v415
  %424 = vmatprep.subr.mxu0 0.0
  %425 = vmatpush1.msra.mxu0 %v416
  %426 = vmatprep.subr.mxu0 0.0
  %427 = vmatpush1.msra.mxu0 %v417
  %428 = vmatprep.subr.mxu0 0.0
  %429 = vmatpush1.msra.mxu0 0.0
  %430 = vmatprep.subr.mxu0 0.0
  %431 = vmatpush1.msra.mxu0 0.0
  %432 = vmatprep.subr.mxu0 0.0
  %433 = vmatpush1.msra.mxu0 0.0
  %434 = vmatprep.subr.mxu0 0.0
  %435 = vmatpush1.msra.mxu0 0.0
  %436 = vmatprep.subr.mxu0 0.0
  %437 = vmatpush1.msra.mxu0 0.0
  %438 = vmatprep.subr.mxu0 0.0
  %439 = vmatpush1.msra.mxu0 0.0
  %440 = vmatprep.subr.mxu0 0.0
  %441 = vmatpush1.msra.mxu0 0.0
  %442 = vmatprep.subr.mxu0 0.0
  %443 = vmatpush1.msra.mxu0 0.0
  %444 = vmatprep.subr.mxu0 0.0
  %445 = vmatpush1.msra.mxu0 0.0
  %446 = vmatprep.subr.mxu0 0.0
  %447 = vmatpush1.msra.mxu0 0.0
  %448 = vmatprep.subr.mxu0 0.0
  %449 = vmatpush1.msra.mxu0 0.0
  %450 = vmatprep.subr.mxu0 0.0
  %451 = vmatpush1.msra.mxu0 0.0
  %452 = vmatprep.subr.mxu0 0.0
  %453 = vmatpush1.msra.mxu0 0.0
  %454 = vmatprep.subr.mxu0 0.0
  %455 = vmatpush1.msra.mxu0 0.0
  %456 = vmatprep.subr.mxu0 0.0
  %457 = vmatpush1.msra.mxu0 0.0
  %458 = vmatprep.subr.mxu0 0.0
  %459 = vmatpush1.msra.mxu0 0.0
  %460 = vmatprep.subr.mxu0 0.0
  %461 = vmatpush1.msra.mxu0 0.0
  %462 = vmatprep.subr.mxu0 0.0
  %463 = vmatpush1.msra.mxu0 0.0
  %464 = vmatprep.subr.mxu0 0.0
  %465 = vmatpush1.msra.mxu0 0.0
  %466 = vmatprep.subr.mxu0 0.0
  %467 = vmatpush1.msra.mxu0 0.0
  %468 = vmatprep.subr.mxu0 0.0
  %469 = vmatpush1.msra.mxu0 0.0
  %470 = vmatprep.subr.mxu0 0.0
  %471 = vmatpush1.msra.mxu0 0.0
  %472 = vmatprep.subr.mxu0 0.0
  %473 = vmatpush1.msra.mxu0 0.0
  %474 = vmatprep.subr.mxu0 0.0
  %475 = vmatpush1.msra.mxu0 0.0
  %476 = vmatprep.subr.mxu0 0.0
  %477 = vmatpush1.msra.mxu0 0.0
  %478 = vmatprep.subr.mxu0 0.0
  %479 = vmatpush1.msra.mxu0 0.0
  %480 = vmatprep.subr.mxu0 0.0
  %481 = vmatpush1.msra.mxu0 0.0
  %482 = vmatprep.subr.mxu0 0.0
  %483 = vmatpush1.msra.mxu0 0.0
  %484 = vmatprep.mubr.f32.mxu0 0.0
  %485 = vmatmul.mubr.f32.gmra.mrb[0].mxu0 %v418
  %v486 = vpop.f32.mrb[0].mxu0
  %v487 = vadd.f32 0.0, %v486
  %v488 = vpop.f32.mrb[0].mxu0
  %489 = vdwg.mxu0
  %v490 = vadd.f32 %v413, %v487
  %v491 = vtanh.pop %v490
  %v492 = vxor.u32 %v490, 2147483648
  %v493 = vmul.f32 %v492, 1.442695
  %v494 = vpow.pop %v493
  %v495 = vadd.f32 %v494, 1.0
  %v496 = vrcp.pop %v495
  %v497 = vmul.f32 1.0, %v496
  %v498 = vsel %vm36, %v491, %v497
  %v499 = vmul.f32 %v498, %v399
  %501 = vrot.lane.b32.xlu0 %v498, 64
  %v502 = vpop.permute.xlu0 %501
  %v504 = vmul.f32 %v498, %v502
  %506 = vrot.lane.b32.xlu0 %v504, 32
  %v507 = vpop.permute.xlu0 %506
  %v509 = vadd.f32 %v499, %v507
  %v510 = vtanh.pop %v509
  %512 = vrot.lane.b32.xlu0 %v510, 64
  %v513 = vpop.permute.xlu0 %512
  %v515 = vmul.f32 %v498, %v513
  %517 = vrot.lane.b32.xlu0 %v515, 32
  %v518 = vpop.permute.xlu0 %517
  %s520 = scalar_lea.vmem [#allocation3], 16
  %521 = vst.msk [vmem:[%s520] sm:$0xff] %vm197, %v518
  %s522 = scalar_lea.vmem [#allocation2], 24
  %v523 = vld [vmem:[%s522] sm:$0xff]
  %v524 = vld [vmem:[%s2] sm:$0xff]
  %v525 = vld [vmem:[%s2 + $0x8] sm:$0xff]
  %v526 = vld [vmem:[%s2 + $0x10] sm:$0xff]
  %v527 = vld [vmem:[%s2 + $0x18] sm:$0xff]
  %v528 = vsel %vm197, %v518, 0
  %530 = vmatprep.subr.mxu0 0.0
  %531 = vmatpush1.msra.mxu0 %v524
  %532 = vmatprep.subr.mxu0 0.0
  %533 = vmatpush1.msra.mxu0 %v525
  %534 = vmatprep.subr.mxu0 0.0
  %535 = vmatpush1.msra.mxu0 %v526
  %536 = vmatprep.subr.mxu0 0.0
  %537 = vmatpush1.msra.mxu0 %v527
  %538 = vmatprep.subr.mxu0 0.0
  %539 = vmatpush1.msra.mxu0 0.0
  %540 = vmatprep.subr.mxu0 0.0
  %541 = vmatpush1.msra.mxu0 0.0
  %542 = vmatprep.subr.mxu0 0.0
  %543 = vmatpush1.msra.mxu0 0.0
  %544 = vmatprep.subr.mxu0 0.0
  %545 = vmatpush1.msra.mxu0 0.0
  %546 = vmatprep.subr.mxu0 0.0
  %547 = vmatpush1.msra.mxu0 0.0
  %548 = vmatprep.subr.mxu0 0.0
  %549 = vmatpush1.msra.mxu0 0.0
  %550 = vmatprep.subr.mxu0 0.0
  %551 = vmatpush1.msra.mxu0 0.0
  %552 = vmatprep.subr.mxu0 0.0
  %553 = vmatpush1.msra.mxu0 0.0
  %554 = vmatprep.subr.mxu0 0.0
  %555 = vmatpush1.msra.mxu0 0.0
  %556 = vmatprep.subr.mxu0 0.0
  %557 = vmatpush1.msra.mxu0 0.0
  %558 = vmatprep.subr.mxu0 0.0
  %559 = vmatpush1.msra.mxu0 0.0
  %560 = vmatprep.subr.mxu0 0.0
  %561 = vmatpush1.msra.mxu0 0.0
  %562 = vmatprep.subr.mxu0 0.0
  %563 = vmatpush1.msra.mxu0 0.0
  %564 = vmatprep.subr.mxu0 0.0
  %565 = vmatpush1.msra.mxu0 0.0
  %566 = vmatprep.subr.mxu0 0.0
  %567 = vmatpush1.msra.mxu0 0.0
  %568 = vmatprep.subr.mxu0 0.0
  %569 = vmatpush1.msra.mxu0 0.0
  %570 = vmatprep.subr.mxu0 0.0
  %571 = vmatpush1.msra.mxu0 0.0
  %572 = vmatprep.subr.mxu0 0.0
  %573 = vmatpush1.msra.mxu0 0.0
  %574 = vmatprep.subr.mxu0 0.0
  %575 = vmatpush1.msra.mxu0 0.0
  %576 = vmatprep.subr.mxu0 0.0
  %577 = vmatpush1.msra.mxu0 0.0
  %578 = vmatprep.subr.mxu0 0.0
  %579 = vmatpush1.msra.mxu0 0.0
  %580 = vmatprep.subr.mxu0 0.0
  %581 = vmatpush1.msra.mxu0 0.0
  %582 = vmatprep.subr.mxu0 0.0
  %583 = vmatpush1.msra.mxu0 0.0
  %584 = vmatprep.subr.mxu0 0.0
  %585 = vmatpush1.msra.mxu0 0.0
  %586 = vmatprep.subr.mxu0 0.0
  %587 = vmatpush1.msra.mxu0 0.0
  %588 = vmatprep.subr.mxu0 0.0
  %589 = vmatpush1.msra.mxu0 0.0
  %590 = vmatprep.subr.mxu0 0.0
  %591 = vmatpush1.msra.mxu0 0.0
  %592 = vmatprep.subr.mxu0 0.0
  %593 = vmatpush1.msra.mxu0 0.0
  %594 = vmatprep.mubr.f32.mxu0 0.0
  %595 = vmatmul.mubr.f32.gmra.mrb[0].mxu0 %v528
  %v596 = vpop.f32.mrb[0].mxu0
  %v597 = vadd.f32 0.0, %v596
  %v598 = vpop.f32.mrb[0].mxu0
  %599 = vdwg.mxu0
  %v600 = vadd.f32 %v523, %v597
  %v601 = vtanh.pop %v600
  %v602 = vxor.u32 %v600, 2147483648
  %v603 = vmul.f32 %v602, 1.442695
  %v604 = vpow.pop %v603
  %v605 = vadd.f32 %v604, 1.0
  %v606 = vrcp.pop %v605
  %v607 = vmul.f32 1.0, %v606
  %v608 = vsel %vm36, %v601, %v607
  %v609 = vmul.f32 %v608, %v509
  %611 = vrot.lane.b32.xlu0 %v608, 64
  %v612 = vpop.permute.xlu0 %611
  %v614 = vmul.f32 %v608, %v612
  %616 = vrot.lane.b32.xlu0 %v614, 32
  %v617 = vpop.permute.xlu0 %616
  %v619 = vadd.f32 %v609, %v617
  %v620 = vtanh.pop %v619
  %622 = vrot.lane.b32.xlu0 %v620, 64
  %v623 = vpop.permute.xlu0 %622
  %v625 = vmul.f32 %v608, %v623
  %627 = vrot.lane.b32.xlu0 %v625, 32
  %v628 = vpop.permute.xlu0 %627
  %s630 = scalar_lea.vmem [#allocation3], 24
  %631 = vst.msk [vmem:[%s630] sm:$0xff] %vm197, %v628
  %s632 = scalar_lea.vmem [#allocation2], 32
  %v633 = vld [vmem:[%s632] sm:$0xff]
  %v634 = vld [vmem:[%s2] sm:$0xff]
  %v635 = vld [vmem:[%s2 + $0x8] sm:$0xff]
  %v636 = vld [vmem:[%s2 + $0x10] sm:$0xff]
  %v637 = vld [vmem:[%s2 + $0x18] sm:$0xff]
  %v638 = vsel %vm197, %v628, 0
  %640 = vmatprep.subr.mxu0 0.0
  %641 = vmatpush1.msra.mxu0 %v634
  %642 = vmatprep.subr.mxu0 0.0
  %643 = vmatpush1.msra.mxu0 %v635
  %644 = vmatprep.subr.mxu0 0.0
  %645 = vmatpush1.msra.mxu0 %v636
  %646 = vmatprep.subr.mxu0 0.0
  %647 = vmatpush1.msra.mxu0 %v637
  %648 = vmatprep.subr.mxu0 0.0
  %649 = vmatpush1.msra.mxu0 0.0
  %650 = vmatprep.subr.mxu0 0.0
  %651 = vmatpush1.msra.mxu0 0.0
  %652 = vmatprep.subr.mxu0 0.0
  %653 = vmatpush1.msra.mxu0 0.0
  %654 = vmatprep.subr.mxu0 0.0
  %655 = vmatpush1.msra.mxu0 0.0
  %656 = vmatprep.subr.mxu0 0.0
  %657 = vmatpush1.msra.mxu0 0.0
  %658 = vmatprep.subr.mxu0 0.0
  %659 = vmatpush1.msra.mxu0 0.0
  %660 = vmatprep.subr.mxu0 0.0
  %661 = vmatpush1.msra.mxu0 0.0
  %662 = vmatprep.subr.mxu0 0.0
  %663 = vmatpush1.msra.mxu0 0.0
  %664 = vmatprep.subr.mxu0 0.0
  %665 = vmatpush1.msra.mxu0 0.0
  %666 = vmatprep.subr.mxu0 0.0
  %667 = vmatpush1.msra.mxu0 0.0
  %668 = vmatprep.subr.mxu0 0.0
  %669 = vmatpush1.msra.mxu0 0.0
  %670 = vmatprep.subr.mxu0 0.0
  %671 = vmatpush1.msra.mxu0 0.0
  %672 = vmatprep.subr.mxu0 0.0
  %673 = vmatpush1.msra.mxu0 0.0
  %674 = vmatprep.subr.mxu0 0.0
  %675 = vmatpush1.msra.mxu0 0.0
  %676 = vmatprep.subr.mxu0 0.0
  %677 = vmatpush1.msra.mxu0 0.0
  %678 = vmatprep.subr.mxu0 0.0
  %679 = vmatpush1.msra.mxu0 0.0
  %680 = vmatprep.subr.mxu0 0.0
  %681 = vmatpush1.msra.mxu0 0.0
  %682 = vmatprep.subr.mxu0 0.0
  %683 = vmatpush1.msra.mxu0 0.0
  %684 = vmatprep.subr.mxu0 0.0
  %685 = vmatpush1.msra.mxu0 0.0
  %686 = vmatprep.subr.mxu0 0.0
  %687 = vmatpush1.msra.mxu0 0.0
  %688 = vmatprep.subr.mxu0 0.0
  %689 = vmatpush1.msra.mxu0 0.0
  %690 = vmatprep.subr.mxu0 0.0
  %691 = vmatpush1.msra.mxu0 0.0
  %692 = vmatprep.subr.mxu0 0.0
  %693 = vmatpush1.msra.mxu0 0.0
  %694 = vmatprep.subr.mxu0 0.0
  %695 = vmatpush1.msra.mxu0 0.0
  %696 = vmatprep.subr.mxu0 0.0
  %697 = vmatpush1.msra.mxu0 0.0
  %698 = vmatprep.subr.mxu0 0.0
  %699 = vmatpush1.msra.mxu0 0.0
  %700 = vmatprep.subr.mxu0 0.0
  %701 = vmatpush1.msra.mxu0 0.0
  %702 = vmatprep.subr.mxu0 0.0
  %703 = vmatpush1.msra.mxu0 0.0
  %704 = vmatprep.mubr.f32.mxu0 0.0
  %705 = vmatmul.mubr.f32.gmra.mrb[0].mxu0 %v638
  %v706 = vpop.f32.mrb[0].mxu0
  %v707 = vadd.f32 0.0, %v706
  %v708 = vpop.f32.mrb[0].mxu0
  %709 = vdwg.mxu0
  %v710 = vadd.f32 %v633, %v707
  %v711 = vtanh.pop %v710
  %v712 = vxor.u32 %v710, 2147483648
  %v713 = vmul.f32 %v712, 1.442695
  %v714 = vpow.pop %v713
  %v715 = vadd.f32 %v714, 1.0
  %v716 = vrcp.pop %v715
  %v717 = vmul.f32 1.0, %v716
  %v718 = vsel %vm36, %v711, %v717
  %v719 = vmul.f32 %v718, %v619
  %721 = vrot.lane.b32.xlu0 %v718, 64
  %v722 = vpop.permute.xlu0 %721
  %v724 = vmul.f32 %v718, %v722
  %726 = vrot.lane.b32.xlu0 %v724, 32
  %v727 = vpop.permute.xlu0 %726
  %v729 = vadd.f32 %v719, %v727
  %v730 = vtanh.pop %v729
  %732 = vrot.lane.b32.xlu0 %v730, 64
  %v733 = vpop.permute.xlu0 %732
  %v735 = vmul.f32 %v718, %v733
  %737 = vrot.lane.b32.xlu0 %v735, 32
  %v738 = vpop.permute.xlu0 %737
  %s740 = scalar_lea.vmem [#allocation3], 32
  %741 = vst.msk [vmem:[%s740] sm:$0xff] %vm197, %v738
  %s742 = scalar_lea.vmem [#allocation2], 40
  %v743 = vld [vmem:[%s742] sm:$0xff]
  %v744 = vld [vmem:[%s2] sm:$0xff]
  %v745 = vld [vmem:[%s2 + $0x8] sm:$0xff]
  %v746 = vld [vmem:[%s2 + $0x10] sm:$0xff]
  %v747 = vld [vmem:[%s2 + $0x18] sm:$0xff]
  %v748 = vsel %vm197, %v738, 0
  %750 = vmatprep.subr.mxu0 0.0
  %751 = vmatpush1.msra.mxu0 %v744
  %752 = vmatprep.subr.mxu0 0.0
  %753 = vmatpush1.msra.mxu0 %v745
  %754 = vmatprep.subr.mxu0 0.0
  %755 = vmatpush1.msra.mxu0 %v746
  %756 = vmatprep.subr.mxu0 0.0
  %757 = vmatpush1.msra.mxu0 %v747
  %758 = vmatprep.subr.mxu0 0.0
  %759 = vmatpush1.msra.mxu0 0.0
  %760 = vmatprep.subr.mxu0 0.0
  %761 = vmatpush1.msra.mxu0 0.0
  %762 = vmatprep.subr.mxu0 0.0
  %763 = vmatpush1.msra.mxu0 0.0
  %764 = vmatprep.subr.mxu0 0.0
  %765 = vmatpush1.msra.mxu0 0.0
  %766 = vmatprep.subr.mxu0 0.0
  %767 = vmatpush1.msra.mxu0 0.0
  %768 = vmatprep.subr.mxu0 0.0
  %769 = vmatpush1.msra.mxu0 0.0
  %770 = vmatprep.subr.mxu0 0.0
  %771 = vmatpush1.msra.mxu0 0.0
  %772 = vmatprep.subr.mxu0 0.0
  %773 = vmatpush1.msra.mxu0 0.0
  %774 = vmatprep.subr.mxu0 0.0
  %775 = vmatpush1.msra.mxu0 0.0
  %776 = vmatprep.subr.mxu0 0.0
  %777 = vmatpush1.msra.mxu0 0.0
  %778 = vmatprep.subr.mxu0 0.0
  %779 = vmatpush1.msra.mxu0 0.0
  %780 = vmatprep.subr.mxu0 0.0
  %781 = vmatpush1.msra.mxu0 0.0
  %782 = vmatprep.subr.mxu0 0.0
  %783 = vmatpush1.msra.mxu0 0.0
  %784 = vmatprep.subr.mxu0 0.0
  %785 = vmatpush1.msra.mxu0 0.0
  %786 = vmatprep.subr.mxu0 0.0
  %787 = vmatpush1.msra.mxu0 0.0
  %788 = vmatprep.subr.mxu0 0.0
  %789 = vmatpush1.msra.mxu0 0.0
  %790 = vmatprep.subr.mxu0 0.0
  %791 = vmatpush1.msra.mxu0 0.0
  %792 = vmatprep.subr.mxu0 0.0
  %793 = vmatpush1.msra.mxu0 0.0
  %794 = vmatprep.subr.mxu0 0.0
  %795 = vmatpush1.msra.mxu0 0.0
  %796 = vmatprep.subr.mxu0 0.0
  %797 = vmatpush1.msra.mxu0 0.0
  %798 = vmatprep.subr.mxu0 0.0
  %799 = vmatpush1.msra.mxu0 0.0
  %800 = vmatprep.subr.mxu0 0.0
  %801 = vmatpush1.msra.mxu0 0.0
  %802 = vmatprep.subr.mxu0 0.0
  %803 = vmatpush1.msra.mxu0 0.0
  %804 = vmatprep.subr.mxu0 0.0
  %805 = vmatpush1.msra.mxu0 0.0
  %806 = vmatprep.subr.mxu0 0.0
  %807 = vmatpush1.msra.mxu0 0.0
  %808 = vmatprep.subr.mxu0 0.0
  %809 = vmatpush1.msra.mxu0 0.0
  %810 = vmatprep.subr.mxu0 0.0
  %811 = vmatpush1.msra.mxu0 0.0
  %812 = vmatprep.subr.mxu0 0.0
  %813 = vmatpush1.msra.mxu0 0.0
  %814 = vmatprep.mubr.f32.mxu0 0.0
  %815 = vmatmul.mubr.f32.gmra.mrb[0].mxu0 %v748
  %v816 = vpop.f32.mrb[0].mxu0
  %v817 = vadd.f32 0.0, %v816
  %v818 = vpop.f32.mrb[0].mxu0
  %819 = vdwg.mxu0
  %v820 = vadd.f32 %v743, %v817
  %v821 = vtanh.pop %v820
  %v822 = vxor.u32 %v820, 2147483648
  %v823 = vmul.f32 %v822, 1.442695
  %v824 = vpow.pop %v823
  %v825 = vadd.f32 %v824, 1.0
  %v826 = vrcp.pop %v825
  %v827 = vmul.f32 1.0, %v826
  %v828 = vsel %vm36, %v821, %v827
  %v829 = vmul.f32 %v828, %v729
  %831 = vrot.lane.b32.xlu0 %v828, 64
  %v832 = vpop.permute.xlu0 %831
  %v834 = vmul.f32 %v828, %v832
  %836 = vrot.lane.b32.xlu0 %v834, 32
  %v837 = vpop.permute.xlu0 %836
  %v839 = vadd.f32 %v829, %v837
  %v840 = vtanh.pop %v839
  %842 = vrot.lane.b32.xlu0 %v840, 64
  %v843 = vpop.permute.xlu0 %842
  %v845 = vmul.f32 %v828, %v843
  %847 = vrot.lane.b32.xlu0 %v845, 32
  %v848 = vpop.permute.xlu0 %847
  %s850 = scalar_lea.vmem [#allocation3], 40
  %851 = vst.msk [vmem:[%s850] sm:$0xff] %vm197, %v848
  %s852 = scalar_lea.vmem [#allocation2], 48
  %v853 = vld [vmem:[%s852] sm:$0xff]
  %v854 = vld [vmem:[%s2] sm:$0xff]
  %v855 = vld [vmem:[%s2 + $0x8] sm:$0xff]
  %v856 = vld [vmem:[%s2 + $0x10] sm:$0xff]
  %v857 = vld [vmem:[%s2 + $0x18] sm:$0xff]
  %v858 = vsel %vm197, %v848, 0
  %860 = vmatprep.subr.mxu0 0.0
  %861 = vmatpush1.msra.mxu0 %v854
  %862 = vmatprep.subr.mxu0 0.0
  %863 = vmatpush1.msra.mxu0 %v855
  %864 = vmatprep.subr.mxu0 0.0
  %865 = vmatpush1.msra.mxu0 %v856
  %866 = vmatprep.subr.mxu0 0.0
  %867 = vmatpush1.msra.mxu0 %v857
  %868 = vmatprep.subr.mxu0 0.0
  %869 = vmatpush1.msra.mxu0 0.0
  %870 = vmatprep.subr.mxu0 0.0
  %871 = vmatpush1.msra.mxu0 0.0
  %872 = vmatprep.subr.mxu0 0.0
  %873 = vmatpush1.msra.mxu0 0.0
  %874 = vmatprep.subr.mxu0 0.0
  %875 = vmatpush1.msra.mxu0 0.0
  %876 = vmatprep.subr.mxu0 0.0
  %877 = vmatpush1.msra.mxu0 0.0
  %878 = vmatprep.subr.mxu0 0.0
  %879 = vmatpush1.msra.mxu0 0.0
  %880 = vmatprep.subr.mxu0 0.0
  %881 = vmatpush1.msra.mxu0 0.0
  %882 = vmatprep.subr.mxu0 0.0
  %883 = vmatpush1.msra.mxu0 0.0
  %884 = vmatprep.subr.mxu0 0.0
  %885 = vmatpush1.msra.mxu0 0.0
  %886 = vmatprep.subr.mxu0 0.0
  %887 = vmatpush1.msra.mxu0 0.0
  %888 = vmatprep.subr.mxu0 0.0
  %889 = vmatpush1.msra.mxu0 0.0
  %890 = vmatprep.subr.mxu0 0.0
  %891 = vmatpush1.msra.mxu0 0.0
  %892 = vmatprep.subr.mxu0 0.0
  %893 = vmatpush1.msra.mxu0 0.0
  %894 = vmatprep.subr.mxu0 0.0
  %895 = vmatpush1.msra.mxu0 0.0
  %896 = vmatprep.subr.mxu0 0.0
  %897 = vmatpush1.msra.mxu0 0.0
  %898 = vmatprep.subr.mxu0 0.0
  %899 = vmatpush1.msra.mxu0 0.0
  %900 = vmatprep.subr.mxu0 0.0
  %901 = vmatpush1.msra.mxu0 0.0
  %902 = vmatprep.subr.mxu0 0.0
  %903 = vmatpush1.msra.mxu0 0.0
  %904 = vmatprep.subr.mxu0 0.0
  %905 = vmatpush1.msra.mxu0 0.0
  %906 = vmatprep.subr.mxu0 0.0
  %907 = vmatpush1.msra.mxu0 0.0
  %908 = vmatprep.subr.mxu0 0.0
  %909 = vmatpush1.msra.mxu0 0.0
  %910 = vmatprep.subr.mxu0 0.0
  %911 = vmatpush1.msra.mxu0 0.0
  %912 = vmatprep.subr.mxu0 0.0
  %913 = vmatpush1.msra.mxu0 0.0
  %914 = vmatprep.subr.mxu0 0.0
  %915 = vmatpush1.msra.mxu0 0.0
  %916 = vmatprep.subr.mxu0 0.0
  %917 = vmatpush1.msra.mxu0 0.0
  %918 = vmatprep.subr.mxu0 0.0
  %919 = vmatpush1.msra.mxu0 0.0
  %920 = vmatprep.subr.mxu0 0.0
  %921 = vmatpush1.msra.mxu0 0.0
  %922 = vmatprep.subr.mxu0 0.0
  %923 = vmatpush1.msra.mxu0 0.0
  %924 = vmatprep.mubr.f32.mxu0 0.0
  %925 = vmatmul.mubr.f32.gmra.mrb[0].mxu0 %v858
  %v926 = vpop.f32.mrb[0].mxu0
  %v927 = vadd.f32 0.0, %v926
  %v928 = vpop.f32.mrb[0].mxu0
  %929 = vdwg.mxu0
  %v930 = vadd.f32 %v853, %v927
  %v931 = vtanh.pop %v930
  %v932 = vxor.u32 %v930, 2147483648
  %v933 = vmul.f32 %v932, 1.442695
  %v934 = vpow.pop %v933
  %v935 = vadd.f32 %v934, 1.0
  %v936 = vrcp.pop %v935
  %v937 = vmul.f32 1.0, %v936
  %v938 = vsel %vm36, %v931, %v937
  %v939 = vmul.f32 %v938, %v839
  %941 = vrot.lane.b32.xlu0 %v938, 64
  %v942 = vpop.permute.xlu0 %941
  %v944 = vmul.f32 %v938, %v942
  %946 = vrot.lane.b32.xlu0 %v944, 32
  %v947 = vpop.permute.xlu0 %946
  %v949 = vadd.f32 %v939, %v947
  %v950 = vtanh.pop %v949
  %952 = vrot.lane.b32.xlu0 %v950, 64
  %v953 = vpop.permute.xlu0 %952
  %v955 = vmul.f32 %v938, %v953
  %957 = vrot.lane.b32.xlu0 %v955, 32
  %v958 = vpop.permute.xlu0 %957
  %s960 = scalar_lea.vmem [#allocation3], 48
  %961 = vst.msk [vmem:[%s960] sm:$0xff] %vm197, %v958
  %s962 = scalar_lea.vmem [#allocation2], 56
  %v963 = vld [vmem:[%s962] sm:$0xff]
  %v964 = vld [vmem:[%s2] sm:$0xff]
  %v965 = vld [vmem:[%s2 + $0x8] sm:$0xff]
  %v966 = vld [vmem:[%s2 + $0x10] sm:$0xff]
  %v967 = vld [vmem:[%s2 + $0x18] sm:$0xff]
  %v968 = vsel %vm197, %v958, 0
  %970 = vmatprep.subr.mxu0 0.0
  %971 = vmatpush1.msra.mxu0 %v964
  %972 = vmatprep.subr.mxu0 0.0
  %973 = vmatpush1.msra.mxu0 %v965
  %974 = vmatprep.subr.mxu0 0.0
  %975 = vmatpush1.msra.mxu0 %v966
  %976 = vmatprep.subr.mxu0 0.0
  %977 = vmatpush1.msra.mxu0 %v967
  %978 = vmatprep.subr.mxu0 0.0
  %979 = vmatpush1.msra.mxu0 0.0
  %980 = vmatprep.subr.mxu0 0.0
  %981 = vmatpush1.msra.mxu0 0.0
  %982 = vmatprep.subr.mxu0 0.0
  %983 = vmatpush1.msra.mxu0 0.0
  %984 = vmatprep.subr.mxu0 0.0
  %985 = vmatpush1.msra.mxu0 0.0
  %986 = vmatprep.subr.mxu0 0.0
  %987 = vmatpush1.msra.mxu0 0.0
  %988 = vmatprep.subr.mxu0 0.0
  %989 = vmatpush1.msra.mxu0 0.0
  %990 = vmatprep.subr.mxu0 0.0
  %991 = vmatpush1.msra.mxu0 0.0
  %992 = vmatprep.subr.mxu0 0.0
  %993 = vmatpush1.msra.mxu0 0.0
  %994 = vmatprep.subr.mxu0 0.0
  %995 = vmatpush1.msra.mxu0 0.0
  %996 = vmatprep.subr.mxu0 0.0
  %997 = vmatpush1.msra.mxu0 0.0
  %998 = vmatprep.subr.mxu0 0.0
  %999 = vmatpush1.msra.mxu0 0.0
  %1000 = vmatprep.subr.mxu0 0.0
  %1001 = vmatpush1.msra.mxu0 0.0
  %1002 = vmatprep.subr.mxu0 0.0
  %1003 = vmatpush1.msra.mxu0 0.0
  %1004 = vmatprep.subr.mxu0 0.0
  %1005 = vmatpush1.msra.mxu0 0.0
  %1006 = vmatprep.subr.mxu0 0.0
  %1007 = vmatpush1.msra.mxu0 0.0
  %1008 = vmatprep.subr.mxu0 0.0
  %1009 = vmatpush1.msra.mxu0 0.0
  %1010 = vmatprep.subr.mxu0 0.0
  %1011 = vmatpush1.msra.mxu0 0.0
  %1012 = vmatprep.subr.mxu0 0.0
  %1013 = vmatpush1.msra.mxu0 0.0
  %1014 = vmatprep.subr.mxu0 0.0
  %1015 = vmatpush1.msra.mxu0 0.0
  %1016 = vmatprep.subr.mxu0 0.0
  %1017 = vmatpush1.msra.mxu0 0.0
  %1018 = vmatprep.subr.mxu0 0.0
  %1019 = vmatpush1.msra.mxu0 0.0
  %1020 = vmatprep.subr.mxu0 0.0
  %1021 = vmatpush1.msra.mxu0 0.0
  %1022 = vmatprep.subr.mxu0 0.0
  %1023 = vmatpush1.msra.mxu0 0.0
  %1024 = vmatprep.subr.mxu0 0.0
  %1025 = vmatpush1.msra.mxu0 0.0
  %1026 = vmatprep.subr.mxu0 0.0
  %1027 = vmatpush1.msra.mxu0 0.0
  %1028 = vmatprep.subr.mxu0 0.0
  %1029 = vmatpush1.msra.mxu0 0.0
  %1030 = vmatprep.subr.mxu0 0.0
  %1031 = vmatpush1.msra.mxu0 0.0
  %1032 = vmatprep.subr.mxu0 0.0
  %1033 = vmatpush1.msra.mxu0 0.0
  %1034 = vmatprep.mubr.f32.mxu0 0.0
  %1035 = vmatmul.mubr.f32.gmra.mrb[0].mxu0 %v968
  %v1036 = vpop.f32.mrb[0].mxu0
  %v1037 = vadd.f32 0.0, %v1036
  %v1038 = vpop.f32.mrb[0].mxu0
  %1039 = vdwg.mxu0
  %v1040 = vadd.f32 %v963, %v1037
  %v1041 = vtanh.pop %v1040
  %v1042 = vxor.u32 %v1040, 2147483648
  %v1043 = vmul.f32 %v1042, 1.442695
  %v1044 = vpow.pop %v1043
  %v1045 = vadd.f32 %v1044, 1.0
  %v1046 = vrcp.pop %v1045
  %v1047 = vmul.f32 1.0, %v1046
  %v1048 = vsel %vm36, %v1041, %v1047
  %v1049 = vmul.f32 %v1048, %v949
  %1051 = vrot.lane.b32.xlu0 %v1048, 64
  %v1052 = vpop.permute.xlu0 %1051
  %v1054 = vmul.f32 %v1048, %v1052
  %1056 = vrot.lane.b32.xlu0 %v1054, 32
  %v1057 = vpop.permute.xlu0 %1056
  %v1059 = vadd.f32 %v1049, %v1057
  %v1060 = vtanh.pop %v1059
  %1062 = vrot.lane.b32.xlu0 %v1060, 64
  %v1063 = vpop.permute.xlu0 %1062
  %v1065 = vmul.f32 %v1048, %v1063
  %1067 = vrot.lane.b32.xlu0 %v1065, 32
  %v1068 = vpop.permute.xlu0 %1067
  %s1070 = scalar_lea.vmem [#allocation3], 56
  %1071 = vst.msk [vmem:[%s1070] sm:$0xff] %vm197, %v1068
  %v1072 = vld [vmem:[#allocation3] sm:$0xff]
  %v1073 = vld [vmem:[#allocation3 + $0x8] sm:$0xff]
  %v1074 = vld [vmem:[#allocation3 + $0x10] sm:$0xff]
  %v1075 = vld [vmem:[#allocation3 + $0x18] sm:$0xff]
  %v1076 = vld [vmem:[#allocation3 + $0x20] sm:$0xff]
  %v1077 = vld [vmem:[#allocation3 + $0x28] sm:$0xff]
  %v1078 = vld [vmem:[#allocation3 + $0x30] sm:$0xff]
  %v1079 = vld [vmem:[#allocation3 + $0x38] sm:$0xff]
  %v1080 = vld [vmem:[%s4] sm:$0xff]
  %v1081 = vld [vmem:[%s4 + $0x8] sm:$0xff]
  %v1082 = vld [vmem:[%s4 + $0x10] sm:$0xff]
  %v1083 = vld [vmem:[%s4 + $0x18] sm:$0xff]
  %v1084 = vld [vmem:[%s6] sm:$0x1]
  %v1086 = vlaneseq
  %v1087 = vshrl.u32 %v1086, 7
  %v1088 = vsub.s32 0, %v1087
  %v1089 = vrot.slane %v1084, %v1088
  %v1092 = vsel %vm197, %v1072, 0
  %v1095 = vsel %vm197, %v1073, 0
  %v1098 = vsel %vm197, %v1074, 0
  %v1101 = vsel %vm197, %v1075, 0
  %v1104 = vsel %vm197, %v1076, 0
  %v1107 = vsel %vm197, %v1077, 0
  %v1110 = vsel %vm197, %v1078, 0
  %v1113 = vsel %vm197, %v1079, 0
  %1115 = vmatprep.subr.mxu0 0.0
  %1116 = vmatpush1.msra.mxu0 %v1080
  %1117 = vmatprep.subr.mxu0 0.0
  %1118 = vmatpush1.msra.mxu0 %v1081
  %1119 = vmatprep.subr.mxu0 0.0
  %1120 = vmatpush1.msra.mxu0 %v1082
  %1121 = vmatprep.subr.mxu0 0.0
  %1122 = vmatpush1.msra.mxu0 %v1083
  %1123 = vmatprep.subr.mxu0 0.0
  %1124 = vmatpush1.msra.mxu0 0.0
  %1125 = vmatprep.subr.mxu0 0.0
  %1126 = vmatpush1.msra.mxu0 0.0
  %1127 = vmatprep.subr.mxu0 0.0
  %1128 = vmatpush1.msra.mxu0 0.0
  %1129 = vmatprep.subr.mxu0 0.0
  %1130 = vmatpush1.msra.mxu0 0.0
  %1131 = vmatprep.subr.mxu0 0.0
  %1132 = vmatpush1.msra.mxu0 0.0
  %1133 = vmatprep.subr.mxu0 0.0
  %1134 = vmatpush1.msra.mxu0 0.0
  %1135 = vmatprep.subr.mxu0 0.0
  %1136 = vmatpush1.msra.mxu0 0.0
  %1137 = vmatprep.subr.mxu0 0.0
  %1138 = vmatpush1.msra.mxu0 0.0
  %1139 = vmatprep.subr.mxu0 0.0
  %1140 = vmatpush1.msra.mxu0 0.0
  %1141 = vmatprep.subr.mxu0 0.0
  %1142 = vmatpush1.msra.mxu0 0.0
  %1143 = vmatprep.subr.mxu0 0.0
  %1144 = vmatpush1.msra.mxu0 0.0
  %1145 = vmatprep.subr.mxu0 0.0
  %1146 = vmatpush1.msra.mxu0 0.0
  %1147 = vmatprep.subr.mxu0 0.0
  %1148 = vmatpush1.msra.mxu0 0.0
  %1149 = vmatprep.subr.mxu0 0.0
  %1150 = vmatpush1.msra.mxu0 0.0
  %1151 = vmatprep.subr.mxu0 0.0
  %1152 = vmatpush1.msra.mxu0 0.0
  %1153 = vmatprep.subr.mxu0 0.0
  %1154 = vmatpush1.msra.mxu0 0.0
  %1155 = vmatprep.subr.mxu0 0.0
  %1156 = vmatpush1.msra.mxu0 0.0
  %1157 = vmatprep.subr.mxu0 0.0
  %1158 = vmatpush1.msra.mxu0 0.0
  %1159 = vmatprep.subr.mxu0 0.0
  %1160 = vmatpush1.msra.mxu0 0.0
  %1161 = vmatprep.subr.mxu0 0.0
  %1162 = vmatpush1.msra.mxu0 0.0
  %1163 = vmatprep.subr.mxu0 0.0
  %1164 = vmatpush1.msra.mxu0 0.0
  %1165 = vmatprep.subr.mxu0 0.0
  %1166 = vmatpush1.msra.mxu0 0.0
  %1167 = vmatprep.subr.mxu0 0.0
  %1168 = vmatpush1.msra.mxu0 0.0
  %1169 = vmatprep.subr.mxu0 0.0
  %1170 = vmatpush1.msra.mxu0 0.0
  %1171 = vmatprep.subr.mxu0 0.0
  %1172 = vmatpush1.msra.mxu0 0.0
  %1173 = vmatprep.subr.mxu0 0.0
  %1174 = vmatpush1.msra.mxu0 0.0
  %1175 = vmatprep.subr.mxu0 0.0
  %1176 = vmatpush1.msra.mxu0 0.0
  %1177 = vmatprep.subr.mxu0 0.0
  %1178 = vmatpush1.msra.mxu0 0.0
  %1179 = vmatprep.mubr.f32.mxu0 0.0
  %1180 = vmatmul.mubr.f32.gmra.mrb[0].mxu0 %v1092
  %v1181 = vpop.f32.mrb[0].mxu0
  %v1182 = vadd.f32 %v1089, %v1181
  %v1183 = vpop.f32.mrb[0].mxu0
  %1184 = vmatprep.mubr.f32.mxu0 0.0
  %1185 = vmatmul.mubr.f32.gmra.mrb[0].mxu0 %v1095
  %v1186 = vpop.f32.mrb[0].mxu0
  %v1187 = vadd.f32 %v1089, %v1186
  %v1188 = vpop.f32.mrb[0].mxu0
  %1189 = vmatprep.mubr.f32.mxu0 0.0
  %1190 = vmatmul.mubr.f32.gmra.mrb[0].mxu0 %v1098
  %v1191 = vpop.f32.mrb[0].mxu0
  %v1192 = vadd.f32 %v1089, %v1191
  %v1193 = vpop.f32.mrb[0].mxu0
  %1194 = vmatprep.mubr.f32.mxu0 0.0
  %1195 = vmatmul.mubr.f32.gmra.mrb[0].mxu0 %v1101
  %v1196 = vpop.f32.mrb[0].mxu0
  %v1197 = vadd.f32 %v1089, %v1196
  %v1198 = vpop.f32.mrb[0].mxu0
  %1199 = vmatprep.mubr.f32.mxu0 0.0
  %1200 = vmatmul.mubr.f32.gmra.mrb[0].mxu0 %v1104
  %v1201 = vpop.f32.mrb[0].mxu0
  %v1202 = vadd.f32 %v1089, %v1201
  %v1203 = vpop.f32.mrb[0].mxu0
  %1204 = vmatprep.mubr.f32.mxu0 0.0
  %1205 = vmatmul.mubr.f32.gmra.mrb[0].mxu0 %v1107
  %v1206 = vpop.f32.mrb[0].mxu0
  %v1207 = vadd.f32 %v1089, %v1206
  %v1208 = vpop.f32.mrb[0].mxu0
  %1209 = vmatprep.mubr.f32.mxu0 0.0
  %1210 = vmatmul.mubr.f32.gmra.mrb[0].mxu0 %v1110
  %v1211 = vpop.f32.mrb[0].mxu0
  %v1212 = vadd.f32 %v1089, %v1211
  %v1213 = vpop.f32.mrb[0].mxu0
  %1214 = vmatprep.mubr.f32.mxu0 0.0
  %1215 = vmatmul.mubr.f32.gmra.mrb[0].mxu0 %v1113
  %v1216 = vpop.f32.mrb[0].mxu0
  %v1217 = vadd.f32 %v1089, %v1216
  %v1218 = vpop.f32.mrb[0].mxu0
  %1219 = vdwg.mxu0
  %1220 = vst [vmem:[#allocation2] sm:$0xff] %v1182
  %1221 = vst [vmem:[#allocation2 + $0x8] sm:$0xff] %v1187
  %1222 = vst [vmem:[#allocation2 + $0x10] sm:$0xff] %v1192
  %1223 = vst [vmem:[#allocation2 + $0x18] sm:$0xff] %v1197
  %1224 = vst [vmem:[#allocation2 + $0x20] sm:$0xff] %v1202
  %1225 = vst [vmem:[#allocation2 + $0x28] sm:$0xff] %v1207
  %1226 = vst [vmem:[#allocation2 + $0x30] sm:$0xff] %v1212
  %1227 = vst [vmem:[#allocation2 + $0x38] sm:$0xff] %v1217
  %v1228 = vld [vmem:[#allocation2] sm:$0xff]
  %v1229 = vld [vmem:[%s5] sm:$0xff]
  %v1230 = vld [vmem:[%s5 + $0x8] sm:$0xff]
  %v1231 = vld [vmem:[%s5 + $0x10] sm:$0xff]
  %v1232 = vld [vmem:[%s5 + $0x18] sm:$0xff]
  %1233 = vmatprep.subr.mxu0 0.0
  %1234 = vmatpush1.msra.mxu0 %v1229
  %1235 = vmatprep.subr.mxu0 0.0
  %1236 = vmatpush1.msra.mxu0 %v1230
  %1237 = vmatprep.subr.mxu0 0.0
  %1238 = vmatpush1.msra.mxu0 %v1231
  %1239 = vmatprep.subr.mxu0 0.0
  %1240 = vmatpush1.msra.mxu0 %v1232
  %1241 = vmatprep.subr.mxu0 0.0
  %1242 = vmatpush1.msra.mxu0 0.0
  %1243 = vmatprep.subr.mxu0 0.0
  %1244 = vmatpush1.msra.mxu0 0.0
  %1245 = vmatprep.subr.mxu0 0.0
  %1246 = vmatpush1.msra.mxu0 0.0
  %1247 = vmatprep.subr.mxu0 0.0
  %1248 = vmatpush1.msra.mxu0 0.0
  %1249 = vmatprep.subr.mxu0 0.0
  %1250 = vmatpush1.msra.mxu0 0.0
  %1251 = vmatprep.subr.mxu0 0.0
  %1252 = vmatpush1.msra.mxu0 0.0
  %1253 = vmatprep.subr.mxu0 0.0
  %1254 = vmatpush1.msra.mxu0 0.0
  %1255 = vmatprep.subr.mxu0 0.0
  %1256 = vmatpush1.msra.mxu0 0.0
  %1257 = vmatprep.subr.mxu0 0.0
  %1258 = vmatpush1.msra.mxu0 0.0
  %1259 = vmatprep.subr.mxu0 0.0
  %1260 = vmatpush1.msra.mxu0 0.0
  %1261 = vmatprep.subr.mxu0 0.0
  %1262 = vmatpush1.msra.mxu0 0.0
  %1263 = vmatprep.subr.mxu0 0.0
  %1264 = vmatpush1.msra.mxu0 0.0
  %1265 = vmatprep.subr.mxu0 0.0
  %1266 = vmatpush1.msra.mxu0 0.0
  %1267 = vmatprep.subr.mxu0 0.0
  %1268 = vmatpush1.msra.mxu0 0.0
  %1269 = vmatprep.subr.mxu0 0.0
  %1270 = vmatpush1.msra.mxu0 0.0
  %1271 = vmatprep.subr.mxu0 0.0
  %1272 = vmatpush1.msra.mxu0 0.0
  %1273 = vmatprep.subr.mxu0 0.0
  %1274 = vmatpush1.msra.mxu0 0.0
  %1275 = vmatprep.subr.mxu0 0.0
  %1276 = vmatpush1.msra.mxu0 0.0
  %1277 = vmatprep.subr.mxu0 0.0
  %1278 = vmatpush1.msra.mxu0 0.0
  %1279 = vmatprep.subr.mxu0 0.0
  %1280 = vmatpush1.msra.mxu0 0.0
  %1281 = vmatprep.subr.mxu0 0.0
  %1282 = vmatpush1.msra.mxu0 0.0
  %1283 = vmatprep.subr.mxu0 0.0
  %1284 = vmatpush1.msra.mxu0 0.0
  %1285 = vmatprep.subr.mxu0 0.0
  %1286 = vmatpush1.msra.mxu0 0.0
  %1287 = vmatprep.subr.mxu0 0.0
  %1288 = vmatpush1.msra.mxu0 0.0
  %1289 = vmatprep.subr.mxu0 0.0
  %1290 = vmatpush1.msra.mxu0 0.0
  %1291 = vmatprep.subr.mxu0 0.0
  %1292 = vmatpush1.msra.mxu0 0.0
  %1293 = vmatprep.subr.mxu0 0.0
  %1294 = vmatpush1.msra.mxu0 0.0
  %1295 = vmatprep.subr.mxu0 0.0
  %1296 = vmatpush1.msra.mxu0 0.0
  %1297 = vmatprep.mubr.f32.mxu0 0.0
  %1298 = vmatmul.mubr.f32.gmra.mrb[0].mxu0 %v199
  %v1299 = vpop.f32.mrb[0].mxu0
  %v1300 = vadd.f32 0.0, %v1299
  %v1301 = vpop.f32.mrb[0].mxu0
  %1302 = vdwg.mxu0
  %v1303 = vadd.f32 %v1228, %v1300
  %v1304 = vtanh.pop %v1303
  %v1305 = vxor.u32 %v1303, 2147483648
  %v1306 = vmul.f32 %v1305, 1.442695
  %v1307 = vpow.pop %v1306
  %v1308 = vadd.f32 %v1307, 1.0
  %v1309 = vrcp.pop %v1308
  %v1310 = vmul.f32 1.0, %v1309
  %v1311 = vsel %vm36, %v1304, %v1310
  %v1312 = vmul.f32 %v1311, 0.0
  %1314 = vrot.lane.b32.xlu0 %v1311, 64
  %v1315 = vpop.permute.xlu0 %1314
  %v1317 = vmul.f32 %v1311, %v1315
  %1319 = vrot.lane.b32.xlu0 %v1317, 32
  %v1320 = vpop.permute.xlu0 %1319
  %v1322 = vadd.f32 %v1312, %v1320
  %v1323 = vtanh.pop %v1322
  %1325 = vrot.lane.b32.xlu0 %v1323, 64
  %v1326 = vpop.permute.xlu0 %1325
  %v1328 = vmul.f32 %v1311, %v1326
  %v1329 = vld [vmem:[%s302] sm:$0xff]
  %1331 = vrot.lane.b32.xlu0 %v1328, 32
  %v1332 = vpop.permute.xlu0 %1331
  %v1333 = vsel %vm197, %v1332, 0
  %1335 = vmatprep.subr.mxu0 0.0
  %1336 = vmatpush1.msra.mxu0 %v1229
  %1337 = vmatprep.subr.mxu0 0.0
  %1338 = vmatpush1.msra.mxu0 %v1230
  %1339 = vmatprep.subr.mxu0 0.0
  %1340 = vmatpush1.msra.mxu0 %v1231
  %1341 = vmatprep.subr.mxu0 0.0
  %1342 = vmatpush1.msra.mxu0 %v1232
  %1343 = vmatprep.subr.mxu0 0.0
  %1344 = vmatpush1.msra.mxu0 0.0
  %1345 = vmatprep.subr.mxu0 0.0
  %1346 = vmatpush1.msra.mxu0 0.0
  %1347 = vmatprep.subr.mxu0 0.0
  %1348 = vmatpush1.msra.mxu0 0.0
  %1349 = vmatprep.subr.mxu0 0.0
  %1350 = vmatpush1.msra.mxu0 0.0
  %1351 = vmatprep.subr.mxu0 0.0
  %1352 = vmatpush1.msra.mxu0 0.0
  %1353 = vmatprep.subr.mxu0 0.0
  %1354 = vmatpush1.msra.mxu0 0.0
  %1355 = vmatprep.subr.mxu0 0.0
  %1356 = vmatpush1.msra.mxu0 0.0
  %1357 = vmatprep.subr.mxu0 0.0
  %1358 = vmatpush1.msra.mxu0 0.0
  %1359 = vmatprep.subr.mxu0 0.0
  %1360 = vmatpush1.msra.mxu0 0.0
  %1361 = vmatprep.subr.mxu0 0.0
  %1362 = vmatpush1.msra.mxu0 0.0
  %1363 = vmatprep.subr.mxu0 0.0
  %1364 = vmatpush1.msra.mxu0 0.0
  %1365 = vmatprep.subr.mxu0 0.0
  %1366 = vmatpush1.msra.mxu0 0.0
  %1367 = vmatprep.subr.mxu0 0.0
  %1368 = vmatpush1.msra.mxu0 0.0
  %1369 = vmatprep.subr.mxu0 0.0
  %1370 = vmatpush1.msra.mxu0 0.0
  %1371 = vmatprep.subr.mxu0 0.0
  %1372 = vmatpush1.msra.mxu0 0.0
  %1373 = vmatprep.subr.mxu0 0.0
  %1374 = vmatpush1.msra.mxu0 0.0
  %1375 = vmatprep.subr.mxu0 0.0
  %1376 = vmatpush1.msra.mxu0 0.0
  %1377 = vmatprep.subr.mxu0 0.0
  %1378 = vmatpush1.msra.mxu0 0.0
  %1379 = vmatprep.subr.mxu0 0.0
  %1380 = vmatpush1.msra.mxu0 0.0
  %1381 = vmatprep.subr.mxu0 0.0
  %1382 = vmatpush1.msra.mxu0 0.0
  %1383 = vmatprep.subr.mxu0 0.0
  %1384 = vmatpush1.msra.mxu0 0.0
  %1385 = vmatprep.subr.mxu0 0.0
  %1386 = vmatpush1.msra.mxu0 0.0
  %1387 = vmatprep.subr.mxu0 0.0
  %1388 = vmatpush1.msra.mxu0 0.0
  %1389 = vmatprep.subr.mxu0 0.0
  %1390 = vmatpush1.msra.mxu0 0.0
  %1391 = vmatprep.subr.mxu0 0.0
  %1392 = vmatpush1.msra.mxu0 0.0
  %1393 = vmatprep.subr.mxu0 0.0
  %1394 = vmatpush1.msra.mxu0 0.0
  %1395 = vmatprep.subr.mxu0 0.0
  %1396 = vmatpush1.msra.mxu0 0.0
  %1397 = vmatprep.subr.mxu0 0.0
  %1398 = vmatpush1.msra.mxu0 0.0
  %1399 = vmatprep.mubr.f32.mxu0 0.0
  %1400 = vmatmul.mubr.f32.gmra.mrb[0].mxu0 %v1333
  %v1401 = vpop.f32.mrb[0].mxu0
  %v1402 = vadd.f32 0.0, %v1401
  %v1403 = vpop.f32.mrb[0].mxu0
  %1404 = vdwg.mxu0
  %v1405 = vadd.f32 %v1329, %v1402
  %v1406 = vtanh.pop %v1405
  %v1407 = vxor.u32 %v1405, 2147483648
  %v1408 = vmul.f32 %v1407, 1.442695
  %v1409 = vpow.pop %v1408
  %v1410 = vadd.f32 %v1409, 1.0
  %v1411 = vrcp.pop %v1410
  %v1412 = vmul.f32 1.0, %v1411
  %v1413 = vsel %vm36, %v1406, %v1412
  %v1414 = vmul.f32 %v1413, %v1322
  %1416 = vrot.lane.b32.xlu0 %v1413, 64
  %v1417 = vpop.permute.xlu0 %1416
  %v1419 = vmul.f32 %v1413, %v1417
  %1421 = vrot.lane.b32.xlu0 %v1419, 32
  %v1422 = vpop.permute.xlu0 %1421
  %v1424 = vadd.f32 %v1414, %v1422
  %v1425 = vtanh.pop %v1424
  %1427 = vrot.lane.b32.xlu0 %v1425, 64
  %v1428 = vpop.permute.xlu0 %1427
  %v1430 = vmul.f32 %v1413, %v1428
  %v1431 = vld [vmem:[%s412] sm:$0xff]
  %1433 = vrot.lane.b32.xlu0 %v1430, 32
  %v1434 = vpop.permute.xlu0 %1433
  %v1435 = vsel %vm197, %v1434, 0
  %1437 = vmatprep.subr.mxu0 0.0
  %1438 = vmatpush1.msra.mxu0 %v1229
  %1439 = vmatprep.subr.mxu0 0.0
  %1440 = vmatpush1.msra.mxu0 %v1230
  %1441 = vmatprep.subr.mxu0 0.0
  %1442 = vmatpush1.msra.mxu0 %v1231
  %1443 = vmatprep.subr.mxu0 0.0
  %1444 = vmatpush1.msra.mxu0 %v1232
  %1445 = vmatprep.subr.mxu0 0.0
  %1446 = vmatpush1.msra.mxu0 0.0
  %1447 = vmatprep.subr.mxu0 0.0
  %1448 = vmatpush1.msra.mxu0 0.0
  %1449 = vmatprep.subr.mxu0 0.0
  %1450 = vmatpush1.msra.mxu0 0.0
  %1451 = vmatprep.subr.mxu0 0.0
  %1452 = vmatpush1.msra.mxu0 0.0
  %1453 = vmatprep.subr.mxu0 0.0
  %1454 = vmatpush1.msra.mxu0 0.0
  %1455 = vmatprep.subr.mxu0 0.0
  %1456 = vmatpush1.msra.mxu0 0.0
  %1457 = vmatprep.subr.mxu0 0.0
  %1458 = vmatpush1.msra.mxu0 0.0
  %1459 = vmatprep.subr.mxu0 0.0
  %1460 = vmatpush1.msra.mxu0 0.0
  %1461 = vmatprep.subr.mxu0 0.0
  %1462 = vmatpush1.msra.mxu0 0.0
  %1463 = vmatprep.subr.mxu0 0.0
  %1464 = vmatpush1.msra.mxu0 0.0
  %1465 = vmatprep.subr.mxu0 0.0
  %1466 = vmatpush1.msra.mxu0 0.0
  %1467 = vmatprep.subr.mxu0 0.0
  %1468 = vmatpush1.msra.mxu0 0.0
  %1469 = vmatprep.subr.mxu0 0.0
  %1470 = vmatpush1.msra.mxu0 0.0
  %1471 = vmatprep.subr.mxu0 0.0
  %1472 = vmatpush1.msra.mxu0 0.0
  %1473 = vmatprep.subr.mxu0 0.0
  %1474 = vmatpush1.msra.mxu0 0.0
  %1475 = vmatprep.subr.mxu0 0.0
  %1476 = vmatpush1.msra.mxu0 0.0
  %1477 = vmatprep.subr.mxu0 0.0
  %1478 = vmatpush1.msra.mxu0 0.0
  %1479 = vmatprep.subr.mxu0 0.0
  %1480 = vmatpush1.msra.mxu0 0.0
  %1481 = vmatprep.subr.mxu0 0.0
  %1482 = vmatpush1.msra.mxu0 0.0
  %1483 = vmatprep.subr.mxu0 0.0
  %1484 = vmatpush1.msra.mxu0 0.0
  %1485 = vmatprep.subr.mxu0 0.0
  %1486 = vmatpush1.msra.mxu0 0.0
  %1487 = vmatprep.subr.mxu0 0.0
  %1488 = vmatpush1.msra.mxu0 0.0
  %1489 = vmatprep.subr.mxu0 0.0
  %1490 = vmatpush1.msra.mxu0 0.0
  %1491 = vmatprep.subr.mxu0 0.0
  %1492 = vmatpush1.msra.mxu0 0.0
  %1493 = vmatprep.subr.mxu0 0.0
  %1494 = vmatpush1.msra.mxu0 0.0
  %1495 = vmatprep.subr.mxu0 0.0
  %1496 = vmatpush1.msra.mxu0 0.0
  %1497 = vmatprep.subr.mxu0 0.0
  %1498 = vmatpush1.msra.mxu0 0.0
  %1499 = vmatprep.subr.mxu0 0.0
  %1500 = vmatpush1.msra.mxu0 0.0
  %1501 = vmatprep.mubr.f32.mxu0 0.0
  %1502 = vmatmul.mubr.f32.gmra.mrb[0].mxu0 %v1435
  %v1503 = vpop.f32.mrb[0].mxu0
  %v1504 = vadd.f32 0.0, %v1503
  %v1505 = vpop.f32.mrb[0].mxu0
  %1506 = vdwg.mxu0
  %v1507 = vadd.f32 %v1431, %v1504
  %v1508 = vtanh.pop %v1507
  %v1509 = vxor.u32 %v1507, 2147483648
  %v1510 = vmul.f32 %v1509, 1.442695
  %v1511 = vpow.pop %v1510
  %v1512 = vadd.f32 %v1511, 1.0
  %v1513 = vrcp.pop %v1512
  %v1514 = vmul.f32 1.0, %v1513
  %v1515 = vsel %vm36, %v1508, %v1514
  %v1516 = vmul.f32 %v1515, %v1424
  %1518 = vrot.lane.b32.xlu0 %v1515, 64
  %v1519 = vpop.permute.xlu0 %1518
  %v1521 = vmul.f32 %v1515, %v1519
  %1523 = vrot.lane.b32.xlu0 %v1521, 32
  %v1524 = vpop.permute.xlu0 %1523
  %v1526 = vadd.f32 %v1516, %v1524
  %v1527 = vtanh.pop %v1526
  %1529 = vrot.lane.b32.xlu0 %v1527, 64
  %v1530 = vpop.permute.xlu0 %1529
  %v1532 = vmul.f32 %v1515, %v1530
  %v1533 = vld [vmem:[%s522] sm:$0xff]
  %1535 = vrot.lane.b32.xlu0 %v1532, 32
  %v1536 = vpop.permute.xlu0 %1535
  %v1537 = vsel %vm197, %v1536, 0
  %1539 = vmatprep.subr.mxu0 0.0
  %1540 = vmatpush1.msra.mxu0 %v1229
  %1541 = vmatprep.subr.mxu0 0.0
  %1542 = vmatpush1.msra.mxu0 %v1230
  %1543 = vmatprep.subr.mxu0 0.0
  %1544 = vmatpush1.msra.mxu0 %v1231
  %1545 = vmatprep.subr.mxu0 0.0
  %1546 = vmatpush1.msra.mxu0 %v1232
  %1547 = vmatprep.subr.mxu0 0.0
  %1548 = vmatpush1.msra.mxu0 0.0
  %1549 = vmatprep.subr.mxu0 0.0
  %1550 = vmatpush1.msra.mxu0 0.0
  %1551 = vmatprep.subr.mxu0 0.0
  %1552 = vmatpush1.msra.mxu0 0.0
  %1553 = vmatprep.subr.mxu0 0.0
  %1554 = vmatpush1.msra.mxu0 0.0
  %1555 = vmatprep.subr.mxu0 0.0
  %1556 = vmatpush1.msra.mxu0 0.0
  %1557 = vmatprep.subr.mxu0 0.0
  %1558 = vmatpush1.msra.mxu0 0.0
  %1559 = vmatprep.subr.mxu0 0.0
  %1560 = vmatpush1.msra.mxu0 0.0
  %1561 = vmatprep.subr.mxu0 0.0
  %1562 = vmatpush1.msra.mxu0 0.0
  %1563 = vmatprep.subr.mxu0 0.0
  %1564 = vmatpush1.msra.mxu0 0.0
  %1565 = vmatprep.subr.mxu0 0.0
  %1566 = vmatpush1.msra.mxu0 0.0
  %1567 = vmatprep.subr.mxu0 0.0
  %1568 = vmatpush1.msra.mxu0 0.0
  %1569 = vmatprep.subr.mxu0 0.0
  %1570 = vmatpush1.msra.mxu0 0.0
  %1571 = vmatprep.subr.mxu0 0.0
  %1572 = vmatpush1.msra.mxu0 0.0
  %1573 = vmatprep.subr.mxu0 0.0
  %1574 = vmatpush1.msra.mxu0 0.0
  %1575 = vmatprep.subr.mxu0 0.0
  %1576 = vmatpush1.msra.mxu0 0.0
  %1577 = vmatprep.subr.mxu0 0.0
  %1578 = vmatpush1.msra.mxu0 0.0
  %1579 = vmatprep.subr.mxu0 0.0
  %1580 = vmatpush1.msra.mxu0 0.0
  %1581 = vmatprep.subr.mxu0 0.0
  %1582 = vmatpush1.msra.mxu0 0.0
  %1583 = vmatprep.subr.mxu0 0.0
  %1584 = vmatpush1.msra.mxu0 0.0
  %1585 = vmatprep.subr.mxu0 0.0
  %1586 = vmatpush1.msra.mxu0 0.0
  %1587 = vmatprep.subr.mxu0 0.0
  %1588 = vmatpush1.msra.mxu0 0.0
  %1589 = vmatprep.subr.mxu0 0.0
  %1590 = vmatpush1.msra.mxu0 0.0
  %1591 = vmatprep.subr.mxu0 0.0
  %1592 = vmatpush1.msra.mxu0 0.0
  %1593 = vmatprep.subr.mxu0 0.0
  %1594 = vmatpush1.msra.mxu0 0.0
  %1595 = vmatprep.subr.mxu0 0.0
  %1596 = vmatpush1.msra.mxu0 0.0
  %1597 = vmatprep.subr.mxu0 0.0
  %1598 = vmatpush1.msra.mxu0 0.0
  %1599 = vmatprep.subr.mxu0 0.0
  %1600 = vmatpush1.msra.mxu0 0.0
  %1601 = vmatprep.subr.mxu0 0.0
  %1602 = vmatpush1.msra.mxu0 0.0
  %1603 = vmatprep.mubr.f32.mxu0 0.0
  %1604 = vmatmul.mubr.f32.gmra.mrb[0].mxu0 %v1537
  %v1605 = vpop.f32.mrb[0].mxu0
  %v1606 = vadd.f32 0.0, %v1605
  %v1607 = vpop.f32.mrb[0].mxu0
  %1608 = vdwg.mxu0
  %v1609 = vadd.f32 %v1533, %v1606
  %v1610 = vtanh.pop %v1609
  %v1611 = vxor.u32 %v1609, 2147483648
  %v1612 = vmul.f32 %v1611, 1.442695
  %v1613 = vpow.pop %v1612
  %v1614 = vadd.f32 %v1613, 1.0
  %v1615 = vrcp.pop %v1614
  %v1616 = vmul.f32 1.0, %v1615
  %v1617 = vsel %vm36, %v1610, %v1616
  %v1618 = vmul.f32 %v1617, %v1526
  %1620 = vrot.lane.b32.xlu0 %v1617, 64
  %v1621 = vpop.permute.xlu0 %1620
  %v1623 = vmul.f32 %v1617, %v1621
  %1625 = vrot.lane.b32.xlu0 %v1623, 32
  %v1626 = vpop.permute.xlu0 %1625
  %v1628 = vadd.f32 %v1618, %v1626
  %v1629 = vtanh.pop %v1628
  %1631 = vrot.lane.b32.xlu0 %v1629, 64
  %v1632 = vpop.permute.xlu0 %1631
  %v1634 = vmul.f32 %v1617, %v1632
  %v1635 = vld [vmem:[%s632] sm:$0xff]
  %1637 = vrot.lane.b32.xlu0 %v1634, 32
  %v1638 = vpop.permute.xlu0 %1637
  %v1639 = vsel %vm197, %v1638, 0
  %1641 = vmatprep.subr.mxu0 0.0
  %1642 = vmatpush1.msra.mxu0 %v1229
  %1643 = vmatprep.subr.mxu0 0.0
  %1644 = vmatpush1.msra.mxu0 %v1230
  %1645 = vmatprep.subr.mxu0 0.0
  %1646 = vmatpush1.msra.mxu0 %v1231
  %1647 = vmatprep.subr.mxu0 0.0
  %1648 = vmatpush1.msra.mxu0 %v1232
  %1649 = vmatprep.subr.mxu0 0.0
  %1650 = vmatpush1.msra.mxu0 0.0
  %1651 = vmatprep.subr.mxu0 0.0
  %1652 = vmatpush1.msra.mxu0 0.0
  %1653 = vmatprep.subr.mxu0 0.0
  %1654 = vmatpush1.msra.mxu0 0.0
  %1655 = vmatprep.subr.mxu0 0.0
  %1656 = vmatpush1.msra.mxu0 0.0
  %1657 = vmatprep.subr.mxu0 0.0
  %1658 = vmatpush1.msra.mxu0 0.0
  %1659 = vmatprep.subr.mxu0 0.0
  %1660 = vmatpush1.msra.mxu0 0.0
  %1661 = vmatprep.subr.mxu0 0.0
  %1662 = vmatpush1.msra.mxu0 0.0
  %1663 = vmatprep.subr.mxu0 0.0
  %1664 = vmatpush1.msra.mxu0 0.0
  %1665 = vmatprep.subr.mxu0 0.0
  %1666 = vmatpush1.msra.mxu0 0.0
  %1667 = vmatprep.subr.mxu0 0.0
  %1668 = vmatpush1.msra.mxu0 0.0
  %1669 = vmatprep.subr.mxu0 0.0
  %1670 = vmatpush1.msra.mxu0 0.0
  %1671 = vmatprep.subr.mxu0 0.0
  %1672 = vmatpush1.msra.mxu0 0.0
  %1673 = vmatprep.subr.mxu0 0.0
  %1674 = vmatpush1.msra.mxu0 0.0
  %1675 = vmatprep.subr.mxu0 0.0
  %1676 = vmatpush1.msra.mxu0 0.0
  %1677 = vmatprep.subr.mxu0 0.0
  %1678 = vmatpush1.msra.mxu0 0.0
  %1679 = vmatprep.subr.mxu0 0.0
  %1680 = vmatpush1.msra.mxu0 0.0
  %1681 = vmatprep.subr.mxu0 0.0
  %1682 = vmatpush1.msra.mxu0 0.0
  %1683 = vmatprep.subr.mxu0 0.0
  %1684 = vmatpush1.msra.mxu0 0.0
  %1685 = vmatprep.subr.mxu0 0.0
  %1686 = vmatpush1.msra.mxu0 0.0
  %1687 = vmatprep.subr.mxu0 0.0
  %1688 = vmatpush1.msra.mxu0 0.0
  %1689 = vmatprep.subr.mxu0 0.0
  %1690 = vmatpush1.msra.mxu0 0.0
  %1691 = vmatprep.subr.mxu0 0.0
  %1692 = vmatpush1.msra.mxu0 0.0
  %1693 = vmatprep.subr.mxu0 0.0
  %1694 = vmatpush1.msra.mxu0 0.0
  %1695 = vmatprep.subr.mxu0 0.0
  %1696 = vmatpush1.msra.mxu0 0.0
  %1697 = vmatprep.subr.mxu0 0.0
  %1698 = vmatpush1.msra.mxu0 0.0
  %1699 = vmatprep.subr.mxu0 0.0
  %1700 = vmatpush1.msra.mxu0 0.0
  %1701 = vmatprep.subr.mxu0 0.0
  %1702 = vmatpush1.msra.mxu0 0.0
  %1703 = vmatprep.subr.mxu0 0.0
  %1704 = vmatpush1.msra.mxu0 0.0
  %1705 = vmatprep.mubr.f32.mxu0 0.0
  %1706 = vmatmul.mubr.f32.gmra.mrb[0].mxu0 %v1639
  %v1707 = vpop.f32.mrb[0].mxu0
  %v1708 = vadd.f32 0.0, %v1707
  %v1709 = vpop.f32.mrb[0].mxu0
  %1710 = vdwg.mxu0
  %v1711 = vadd.f32 %v1635, %v1708
  %v1712 = vtanh.pop %v1711
  %v1713 = vxor.u32 %v1711, 2147483648
  %v1714 = vmul.f32 %v1713, 1.442695
  %v1715 = vpow.pop %v1714
  %v1716 = vadd.f32 %v1715, 1.0
  %v1717 = vrcp.pop %v1716
  %v1718 = vmul.f32 1.0, %v1717
  %v1719 = vsel %vm36, %v1712, %v1718
  %v1720 = vmul.f32 %v1719, %v1628
  %1722 = vrot.lane.b32.xlu0 %v1719, 64
  %v1723 = vpop.permute.xlu0 %1722
  %v1725 = vmul.f32 %v1719, %v1723
  %1727 = vrot.lane.b32.xlu0 %v1725, 32
  %v1728 = vpop.permute.xlu0 %1727
  %v1730 = vadd.f32 %v1720, %v1728
  %v1731 = vtanh.pop %v1730
  %1733 = vrot.lane.b32.xlu0 %v1731, 64
  %v1734 = vpop.permute.xlu0 %1733
  %v1736 = vmul.f32 %v1719, %v1734
  %v1737 = vld [vmem:[%s742] sm:$0xff]
  %1739 = vrot.lane.b32.xlu0 %v1736, 32
  %v1740 = vpop.permute.xlu0 %1739
  %v1741 = vsel %vm197, %v1740, 0
  %1743 = vmatprep.subr.mxu0 0.0
  %1744 = vmatpush1.msra.mxu0 %v1229
  %1745 = vmatprep.subr.mxu0 0.0
  %1746 = vmatpush1.msra.mxu0 %v1230
  %1747 = vmatprep.subr.mxu0 0.0
  %1748 = vmatpush1.msra.mxu0 %v1231
  %1749 = vmatprep.subr.mxu0 0.0
  %1750 = vmatpush1.msra.mxu0 %v1232
  %1751 = vmatprep.subr.mxu0 0.0
  %1752 = vmatpush1.msra.mxu0 0.0
  %1753 = vmatprep.subr.mxu0 0.0
  %1754 = vmatpush1.msra.mxu0 0.0
  %1755 = vmatprep.subr.mxu0 0.0
  %1756 = vmatpush1.msra.mxu0 0.0
  %1757 = vmatprep.subr.mxu0 0.0
  %1758 = vmatpush1.msra.mxu0 0.0
  %1759 = vmatprep.subr.mxu0 0.0
  %1760 = vmatpush1.msra.mxu0 0.0
  %1761 = vmatprep.subr.mxu0 0.0
  %1762 = vmatpush1.msra.mxu0 0.0
  %1763 = vmatprep.subr.mxu0 0.0
  %1764 = vmatpush1.msra.mxu0 0.0
  %1765 = vmatprep.subr.mxu0 0.0
  %1766 = vmatpush1.msra.mxu0 0.0
  %1767 = vmatprep.subr.mxu0 0.0
  %1768 = vmatpush1.msra.mxu0 0.0
  %1769 = vmatprep.subr.mxu0 0.0
  %1770 = vmatpush1.msra.mxu0 0.0
  %1771 = vmatprep.subr.mxu0 0.0
  %1772 = vmatpush1.msra.mxu0 0.0
  %1773 = vmatprep.subr.mxu0 0.0
  %1774 = vmatpush1.msra.mxu0 0.0
  %1775 = vmatprep.subr.mxu0 0.0
  %1776 = vmatpush1.msra.mxu0 0.0
  %1777 = vmatprep.subr.mxu0 0.0
  %1778 = vmatpush1.msra.mxu0 0.0
  %1779 = vmatprep.subr.mxu0 0.0
  %1780 = vmatpush1.msra.mxu0 0.0
  %1781 = vmatprep.subr.mxu0 0.0
  %1782 = vmatpush1.msra.mxu0 0.0
  %1783 = vmatprep.subr.mxu0 0.0
  %1784 = vmatpush1.msra.mxu0 0.0
  %1785 = vmatprep.subr.mxu0 0.0
  %1786 = vmatpush1.msra.mxu0 0.0
  %1787 = vmatprep.subr.mxu0 0.0
  %1788 = vmatpush1.msra.mxu0 0.0
  %1789 = vmatprep.subr.mxu0 0.0
  %1790 = vmatpush1.msra.mxu0 0.0
  %1791 = vmatprep.subr.mxu0 0.0
  %1792 = vmatpush1.msra.mxu0 0.0
  %1793 = vmatprep.subr.mxu0 0.0
  %1794 = vmatpush1.msra.mxu0 0.0
  %1795 = vmatprep.subr.mxu0 0.0
  %1796 = vmatpush1.msra.mxu0 0.0
  %1797 = vmatprep.subr.mxu0 0.0
  %1798 = vmatpush1.msra.mxu0 0.0
  %1799 = vmatprep.subr.mxu0 0.0
  %1800 = vmatpush1.msra.mxu0 0.0
  %1801 = vmatprep.subr.mxu0 0.0
  %1802 = vmatpush1.msra.mxu0 0.0
  %1803 = vmatprep.subr.mxu0 0.0
  %1804 = vmatpush1.msra.mxu0 0.0
  %1805 = vmatprep.subr.mxu0 0.0
  %1806 = vmatpush1.msra.mxu0 0.0
  %1807 = vmatprep.mubr.f32.mxu0 0.0
  %1808 = vmatmul.mubr.f32.gmra.mrb[0].mxu0 %v1741
  %v1809 = vpop.f32.mrb[0].mxu0
  %v1810 = vadd.f32 0.0, %v1809
  %v1811 = vpop.f32.mrb[0].mxu0
  %1812 = vdwg.mxu0
  %v1813 = vadd.f32 %v1737, %v1810
  %v1814 = vtanh.pop %v1813
  %v1815 = vxor.u32 %v1813, 2147483648
  %v1816 = vmul.f32 %v1815, 1.442695
  %v1817 = vpow.pop %v1816
  %v1818 = vadd.f32 %v1817, 1.0
  %v1819 = vrcp.pop %v1818
  %v1820 = vmul.f32 1.0, %v1819
  %v1821 = vsel %vm36, %v1814, %v1820
  %v1822 = vmul.f32 %v1821, %v1730
  %1824 = vrot.lane.b32.xlu0 %v1821, 64
  %v1825 = vpop.permute.xlu0 %1824
  %v1827 = vmul.f32 %v1821, %v1825
  %1829 = vrot.lane.b32.xlu0 %v1827, 32
  %v1830 = vpop.permute.xlu0 %1829
  %v1832 = vadd.f32 %v1822, %v1830
  %v1833 = vtanh.pop %v1832
  %1835 = vrot.lane.b32.xlu0 %v1833, 64
  %v1836 = vpop.permute.xlu0 %1835
  %v1838 = vmul.f32 %v1821, %v1836
  %v1839 = vld [vmem:[%s852] sm:$0xff]
  %1841 = vrot.lane.b32.xlu0 %v1838, 32
  %v1842 = vpop.permute.xlu0 %1841
  %v1843 = vsel %vm197, %v1842, 0
  %1845 = vmatprep.subr.mxu0 0.0
  %1846 = vmatpush1.msra.mxu0 %v1229
  %1847 = vmatprep.subr.mxu0 0.0
  %1848 = vmatpush1.msra.mxu0 %v1230
  %1849 = vmatprep.subr.mxu0 0.0
  %1850 = vmatpush1.msra.mxu0 %v1231
  %1851 = vmatprep.subr.mxu0 0.0
  %1852 = vmatpush1.msra.mxu0 %v1232
  %1853 = vmatprep.subr.mxu0 0.0
  %1854 = vmatpush1.msra.mxu0 0.0
  %1855 = vmatprep.subr.mxu0 0.0
  %1856 = vmatpush1.msra.mxu0 0.0
  %1857 = vmatprep.subr.mxu0 0.0
  %1858 = vmatpush1.msra.mxu0 0.0
  %1859 = vmatprep.subr.mxu0 0.0
  %1860 = vmatpush1.msra.mxu0 0.0
  %1861 = vmatprep.subr.mxu0 0.0
  %1862 = vmatpush1.msra.mxu0 0.0
  %1863 = vmatprep.subr.mxu0 0.0
  %1864 = vmatpush1.msra.mxu0 0.0
  %1865 = vmatprep.subr.mxu0 0.0
  %1866 = vmatpush1.msra.mxu0 0.0
  %1867 = vmatprep.subr.mxu0 0.0
  %1868 = vmatpush1.msra.mxu0 0.0
  %1869 = vmatprep.subr.mxu0 0.0
  %1870 = vmatpush1.msra.mxu0 0.0
  %1871 = vmatprep.subr.mxu0 0.0
  %1872 = vmatpush1.msra.mxu0 0.0
  %1873 = vmatprep.subr.mxu0 0.0
  %1874 = vmatpush1.msra.mxu0 0.0
  %1875 = vmatprep.subr.mxu0 0.0
  %1876 = vmatpush1.msra.mxu0 0.0
  %1877 = vmatprep.subr.mxu0 0.0
  %1878 = vmatpush1.msra.mxu0 0.0
  %1879 = vmatprep.subr.mxu0 0.0
  %1880 = vmatpush1.msra.mxu0 0.0
  %1881 = vmatprep.subr.mxu0 0.0
  %1882 = vmatpush1.msra.mxu0 0.0
  %1883 = vmatprep.subr.mxu0 0.0
  %1884 = vmatpush1.msra.mxu0 0.0
  %1885 = vmatprep.subr.mxu0 0.0
  %1886 = vmatpush1.msra.mxu0 0.0
  %1887 = vmatprep.subr.mxu0 0.0
  %1888 = vmatpush1.msra.mxu0 0.0
  %1889 = vmatprep.subr.mxu0 0.0
  %1890 = vmatpush1.msra.mxu0 0.0
  %1891 = vmatprep.subr.mxu0 0.0
  %1892 = vmatpush1.msra.mxu0 0.0
  %1893 = vmatprep.subr.mxu0 0.0
  %1894 = vmatpush1.msra.mxu0 0.0
  %1895 = vmatprep.subr.mxu0 0.0
  %1896 = vmatpush1.msra.mxu0 0.0
  %1897 = vmatprep.subr.mxu0 0.0
  %1898 = vmatpush1.msra.mxu0 0.0
  %1899 = vmatprep.subr.mxu0 0.0
  %1900 = vmatpush1.msra.mxu0 0.0
  %1901 = vmatprep.subr.mxu0 0.0
  %1902 = vmatpush1.msra.mxu0 0.0
  %1903 = vmatprep.subr.mxu0 0.0
  %1904 = vmatpush1.msra.mxu0 0.0
  %1905 = vmatprep.subr.mxu0 0.0
  %1906 = vmatpush1.msra.mxu0 0.0
  %1907 = vmatprep.subr.mxu0 0.0
  %1908 = vmatpush1.msra.mxu0 0.0
  %1909 = vmatprep.mubr.f32.mxu0 0.0
  %1910 = vmatmul.mubr.f32.gmra.mrb[0].mxu0 %v1843
  %v1911 = vpop.f32.mrb[0].mxu0
  %v1912 = vadd.f32 0.0, %v1911
  %v1913 = vpop.f32.mrb[0].mxu0
  %1914 = vdwg.mxu0
  %v1915 = vadd.f32 %v1839, %v1912
  %v1916 = vtanh.pop %v1915
  %v1917 = vxor.u32 %v1915, 2147483648
  %v1918 = vmul.f32 %v1917, 1.442695
  %v1919 = vpow.pop %v1918
  %v1920 = vadd.f32 %v1919, 1.0
  %v1921 = vrcp.pop %v1920
  %v1922 = vmul.f32 1.0, %v1921
  %v1923 = vsel %vm36, %v1916, %v1922
  %v1924 = vmul.f32 %v1923, %v1832
  %1926 = vrot.lane.b32.xlu0 %v1923, 64
  %v1927 = vpop.permute.xlu0 %1926
  %v1929 = vmul.f32 %v1923, %v1927
  %1931 = vrot.lane.b32.xlu0 %v1929, 32
  %v1932 = vpop.permute.xlu0 %1931
  %v1934 = vadd.f32 %v1924, %v1932
  %v1935 = vtanh.pop %v1934
  %1937 = vrot.lane.b32.xlu0 %v1935, 64
  %v1938 = vpop.permute.xlu0 %1937
  %v1940 = vmul.f32 %v1923, %v1938
  %v1941 = vld [vmem:[%s962] sm:$0xff]
  %1943 = vrot.lane.b32.xlu0 %v1940, 32
  %v1944 = vpop.permute.xlu0 %1943
  %v1945 = vsel %vm197, %v1944, 0
  %1947 = vmatprep.subr.mxu0 0.0
  %1948 = vmatpush1.msra.mxu0 %v1229
  %1949 = vmatprep.subr.mxu0 0.0
  %1950 = vmatpush1.msra.mxu0 %v1230
  %1951 = vmatprep.subr.mxu0 0.0
  %1952 = vmatpush1.msra.mxu0 %v1231
  %1953 = vmatprep.subr.mxu0 0.0
  %1954 = vmatpush1.msra.mxu0 %v1232
  %1955 = vmatprep.subr.mxu0 0.0
  %1956 = vmatpush1.msra.mxu0 0.0
  %1957 = vmatprep.subr.mxu0 0.0
  %1958 = vmatpush1.msra.mxu0 0.0
  %1959 = vmatprep.subr.mxu0 0.0
  %1960 = vmatpush1.msra.mxu0 0.0
  %1961 = vmatprep.subr.mxu0 0.0
  %1962 = vmatpush1.msra.mxu0 0.0
  %1963 = vmatprep.subr.mxu0 0.0
  %1964 = vmatpush1.msra.mxu0 0.0
  %1965 = vmatprep.subr.mxu0 0.0
  %1966 = vmatpush1.msra.mxu0 0.0
  %1967 = vmatprep.subr.mxu0 0.0
  %1968 = vmatpush1.msra.mxu0 0.0
  %1969 = vmatprep.subr.mxu0 0.0
  %1970 = vmatpush1.msra.mxu0 0.0
  %1971 = vmatprep.subr.mxu0 0.0
  %1972 = vmatpush1.msra.mxu0 0.0
  %1973 = vmatprep.subr.mxu0 0.0
  %1974 = vmatpush1.msra.mxu0 0.0
  %1975 = vmatprep.subr.mxu0 0.0
  %1976 = vmatpush1.msra.mxu0 0.0
  %1977 = vmatprep.subr.mxu0 0.0
  %1978 = vmatpush1.msra.mxu0 0.0
  %1979 = vmatprep.subr.mxu0 0.0
  %1980 = vmatpush1.msra.mxu0 0.0
  %1981 = vmatprep.subr.mxu0 0.0
  %1982 = vmatpush1.msra.mxu0 0.0
  %1983 = vmatprep.subr.mxu0 0.0
  %1984 = vmatpush1.msra.mxu0 0.0
  %1985 = vmatprep.subr.mxu0 0.0
  %1986 = vmatpush1.msra.mxu0 0.0
  %1987 = vmatprep.subr.mxu0 0.0
  %1988 = vmatpush1.msra.mxu0 0.0
  %1989 = vmatprep.subr.mxu0 0.0
  %1990 = vmatpush1.msra.mxu0 0.0
  %1991 = vmatprep.subr.mxu0 0.0
  %1992 = vmatpush1.msra.mxu0 0.0
  %1993 = vmatprep.subr.mxu0 0.0
  %1994 = vmatpush1.msra.mxu0 0.0
  %1995 = vmatprep.subr.mxu0 0.0
  %1996 = vmatpush1.msra.mxu0 0.0
  %1997 = vmatprep.subr.mxu0 0.0
  %1998 = vmatpush1.msra.mxu0 0.0
  %1999 = vmatprep.subr.mxu0 0.0
  %2000 = vmatpush1.msra.mxu0 0.0
  %2001 = vmatprep.subr.mxu0 0.0
  %2002 = vmatpush1.msra.mxu0 0.0
  %2003 = vmatprep.subr.mxu0 0.0
  %2004 = vmatpush1.msra.mxu0 0.0
  %2005 = vmatprep.subr.mxu0 0.0
  %2006 = vmatpush1.msra.mxu0 0.0
  %2007 = vmatprep.subr.mxu0 0.0
  %2008 = vmatpush1.msra.mxu0 0.0
  %2009 = vmatprep.subr.mxu0 0.0
  %2010 = vmatpush1.msra.mxu0 0.0
  %2011 = vmatprep.mubr.f32.mxu0 0.0
  %2012 = vmatmul.mubr.f32.gmra.mrb[0].mxu0 %v1945
  %v2013 = vpop.f32.mrb[0].mxu0
  %v2014 = vadd.f32 0.0, %v2013
  %v2015 = vpop.f32.mrb[0].mxu0
  %2016 = vdwg.mxu0
  %v2017 = vadd.f32 %v1941, %v2014
  %v2018 = vtanh.pop %v2017
  %v2019 = vxor.u32 %v2017, 2147483648
  %v2020 = vmul.f32 %v2019, 1.442695
  %v2021 = vpow.pop %v2020
  %v2022 = vadd.f32 %v2021, 1.0
  %v2023 = vrcp.pop %v2022
  %v2024 = vmul.f32 1.0, %v2023
  %v2025 = vsel %vm36, %v2018, %v2024
  %v2026 = vmul.f32 %v2025, %v1934
  %2028 = vrot.lane.b32.xlu0 %v2025, 64
  %v2029 = vpop.permute.xlu0 %2028
  %v2031 = vmul.f32 %v2025, %v2029
  %2033 = vrot.lane.b32.xlu0 %v2031, 32
  %v2034 = vpop.permute.xlu0 %2033
  %v2036 = vadd.f32 %v2026, %v2034
  %v2037 = vtanh.pop %v2036
  %2039 = vrot.lane.b32.xlu0 %v2037, 64
  %v2040 = vpop.permute.xlu0 %2039
  %v2042 = vmul.f32 %v2025, %v2040
  %v2043 = vld [vmem:[%s7] sm:$0xff]
  %v2044 = vld [vmem:[%s7 + $0x8] sm:$0xff]
  %v2045 = vld [vmem:[%s7 + $0x10] sm:$0xff]
  %v2046 = vld [vmem:[%s7 + $0x18] sm:$0xff]
  %v2047 = vld [vmem:[%s8] sm:$0x1]
  %v2049 = vlaneseq
  %v2050 = vshrl.u32 %v2049, 7
  %v2051 = vsub.s32 0, %v2050
  %v2052 = vrot.slane %v2047, %v2051
  %2055 = vrot.lane.b32.xlu0 %v2042, 32
  %v2056 = vpop.permute.xlu0 %2055
  %v2057 = vsel %vm197, %v2056, 0
  %2059 = vmatprep.subr.mxu0 0.0
  %2060 = vmatpush1.msra.mxu0 %v2043
  %2061 = vmatprep.subr.mxu0 0.0
  %2062 = vmatpush1.msra.mxu0 %v2044
  %2063 = vmatprep.subr.mxu0 0.0
  %2064 = vmatpush1.msra.mxu0 %v2045
  %2065 = vmatprep.subr.mxu0 0.0
  %2066 = vmatpush1.msra.mxu0 %v2046
  %2067 = vmatprep.subr.mxu0 0.0
  %2068 = vmatpush1.msra.mxu0 0.0
  %2069 = vmatprep.subr.mxu0 0.0
  %2070 = vmatpush1.msra.mxu0 0.0
  %2071 = vmatprep.subr.mxu0 0.0
  %2072 = vmatpush1.msra.mxu0 0.0
  %2073 = vmatprep.subr.mxu0 0.0
  %2074 = vmatpush1.msra.mxu0 0.0
  %2075 = vmatprep.subr.mxu0 0.0
  %2076 = vmatpush1.msra.mxu0 0.0
  %2077 = vmatprep.subr.mxu0 0.0
  %2078 = vmatpush1.msra.mxu0 0.0
  %2079 = vmatprep.subr.mxu0 0.0
  %2080 = vmatpush1.msra.mxu0 0.0
  %2081 = vmatprep.subr.mxu0 0.0
  %2082 = vmatpush1.msra.mxu0 0.0
  %2083 = vmatprep.subr.mxu0 0.0
  %2084 = vmatpush1.msra.mxu0 0.0
  %2085 = vmatprep.subr.mxu0 0.0
  %2086 = vmatpush1.msra.mxu0 0.0
  %2087 = vmatprep.subr.mxu0 0.0
  %2088 = vmatpush1.msra.mxu0 0.0
  %2089 = vmatprep.subr.mxu0 0.0
  %2090 = vmatpush1.msra.mxu0 0.0
  %2091 = vmatprep.subr.mxu0 0.0
  %2092 = vmatpush1.msra.mxu0 0.0
  %2093 = vmatprep.subr.mxu0 0.0
  %2094 = vmatpush1.msra.mxu0 0.0
  %2095 = vmatprep.subr.mxu0 0.0
  %2096 = vmatpush1.msra.mxu0 0.0
  %2097 = vmatprep.subr.mxu0 0.0
  %2098 = vmatpush1.msra.mxu0 0.0
  %2099 = vmatprep.subr.mxu0 0.0
  %2100 = vmatpush1.msra.mxu0 0.0
  %2101 = vmatprep.subr.mxu0 0.0
  %2102 = vmatpush1.msra.mxu0 0.0
  %2103 = vmatprep.subr.mxu0 0.0
  %2104 = vmatpush1.msra.mxu0 0.0
  %2105 = vmatprep.subr.mxu0 0.0
  %2106 = vmatpush1.msra.mxu0 0.0
  %2107 = vmatprep.subr.mxu0 0.0
  %2108 = vmatpush1.msra.mxu0 0.0
  %2109 = vmatprep.subr.mxu0 0.0
  %2110 = vmatpush1.msra.mxu0 0.0
  %2111 = vmatprep.subr.mxu0 0.0
  %2112 = vmatpush1.msra.mxu0 0.0
  %2113 = vmatprep.subr.mxu0 0.0
  %2114 = vmatpush1.msra.mxu0 0.0
  %2115 = vmatprep.subr.mxu0 0.0
  %2116 = vmatpush1.msra.mxu0 0.0
  %2117 = vmatprep.subr.mxu0 0.0
  %2118 = vmatpush1.msra.mxu0 0.0
  %2119 = vmatprep.subr.mxu0 0.0
  %2120 = vmatpush1.msra.mxu0 0.0
  %2121 = vmatprep.subr.mxu0 0.0
  %2122 = vmatpush1.msra.mxu0 0.0
  %2123 = vmatprep.mubr.f32.mxu0 0.0
  %2124 = vmatmul.mubr.f32.gmra.mrb[0].mxu0 %v2057
  %v2125 = vpop.f32.mrb[0].mxu0
  %v2126 = vadd.f32 %v2052, %v2125
  %v2127 = vpop.f32.mrb[0].mxu0
  %2128 = vdwg.mxu0
  %2129 = vst [vmem:[%s9] sm:$0xff] %v2126
  // Predicated region
  $region38: #{recurrent_nn_forward.1} parent=0 // pred_check
    _
  $region39: #{recurrent_nn_forward.1} parent=0 // pred_check_branch
    %2131 = sbr.rel (0) target = $region41
  $region40: #{recurrent_nn_forward.1} parent=0 // pred_region
    _
  $region41: #{recurrent_nn_forward.1} parent=0 // pred_fallthru
    _
  // Predicated region
  $region42: #{recurrent_nn_forward.1} parent=0 // pred_check
    _
  $region43: #{recurrent_nn_forward.1} parent=0 // pred_check_branch
    %2133 = sbr.rel (0) target = $region45
  $region44: #{recurrent_nn_forward.1} parent=0 // pred_region
    _
  $region45: #{recurrent_nn_forward.1} parent=0 // pred_fallthru
    _

</llo_original>
